<compile_context>
chip_gen: v7x
topology: tpu7x:2x2x1
jax: 0.10.0
libtpu: 0.0.40
codegen_flags: <defaults>
</compile_context>

<pallas_src>
import functools

import jax
import jax.numpy as jnp
from jax.experimental import pallas as pl
from jax.experimental.pallas import tpu as pltpu


def _round_up(n, m):
    return ((n + m - 1) // m) * m


def _is_single_tensorcore_chip():
    """True for v5e / v6e (1 TC per chip): fold the batch into the block there."""
    try:
        kind = jax.devices()[0].device_kind.lower()
    except Exception:
        return False
    return any(tag in kind for tag in
               ("v5e", "v5 lite", "v5lite", "v6e", "v6 lite", "v6lite"))


def _latent_kernel(num_hidden_layers, d_out, nb, t_axis, tile_t, t_valid, mask_tail,
                   x_ref, w_in_ref, b_in_ref, w_h_ref, b_h_ref,
                   w_o_ref, b_o_ref, o1_ref, o2_ref):
    # x_ref: (nb, C_in, tile_t) — time on the lane axis.
    if mask_tail:
        # Edge time-tile: columns >= T hold unspecified data (the op is strictly
        # column-local and OOB writes are masked, but zero them defensively).
        col = (jax.lax.broadcasted_iota(jnp.int32, (1, tile_t), 1)
               + pl.program_id(t_axis) * tile_t)
        valid = col < t_valid                               # (1, tile_t)

    for b in range(nb):                                     # nb is small & static
        x = x_ref[b]                                        # (C_in, tile_t)
        if mask_tail:
            x = jnp.where(valid, x, 0.0)
        h = jnp.tanh(
            jnp.dot(w_in_ref[...], x, preferred_element_type=jnp.float32)
            + b_in_ref[...])                                # (H, tile_t)
        for l in range(num_hidden_layers):                  # static unroll
            h = jnp.tanh(
                jnp.dot(w_h_ref[l], h, preferred_element_type=jnp.float32)
                + b_h_ref[l])
        # Fused output projection: one (2*D_out, H) @ (H, tile_t) matmul.
        out = (jnp.dot(w_o_ref[...], h, preferred_element_type=jnp.float32)
               + b_o_ref[...])                              # (2*D_out, tile_t)
        o1_ref[b] = out[:d_out, :].astype(o1_ref.dtype)
        o2_ref[b] = out[d_out:, :].astype(o2_ref.dtype)


def fuse_output_heads(params):
    """One-time parameter prep: fuse the two output heads (hoisted out of the call path)."""
    (w_in, b_in, w_h, b_h, w_o1, b_o1, w_o2, b_o2) = params
    w_o = jnp.concatenate([w_o1, w_o2], axis=0)             # (2D, H)
    b_o = jnp.concatenate([b_o1, b_o2], axis=0)             # (2D, 1)
    return (w_in, b_in, w_h, b_h, w_o, b_o)


def latent_layer_pallas(x, fused_params, *, num_hidden_layers=None,
                        tile_t=2048, fold_batch=None):
    """x: (B, C_in, T) float32 (NCT).  Returns (out1, out2), each (B, D_out, T)."""
    (w_in, b_in, w_h, b_h, w_o, b_o) = fused_params
    B, C_in, T = x.shape
    H = w_in.shape[0]
    D = w_o.shape[0] // 2
    L_store = w_h.shape[0]
    if num_hidden_layers is None:
        num_hidden_layers = L_store
    assert num_hidden_layers <= L_store, "num_hidden_layers exceeds stored hidden weights"

    if fold_batch is None:
        fold_batch = _is_single_tensorcore_chip()

    # Cap tile_t at the sequence length (rounded to a lane multiple); no HBM padding.
    tile_t = max(128, min(tile_t, _round_up(T, 128)))
    # Dual-TC chips with B == 1: keep >= 2 parallel time tiles so no core idles.
    if (not fold_batch) and B == 1 and T > 128 and pl.cdiv(T, tile_t) < 2:
        tile_t = _round_up(pl.cdiv(T, 2), 128)

    nt = pl.cdiv(T, tile_t)
    mask_tail = (T % tile_t) != 0

    if fold_batch:
        nb, grid, t_axis = B, (nt,), 0
        x_spec = pl.BlockSpec((B, C_in, tile_t), lambda t: (0, 0, t))
        const2 = lambda t: (0, 0)
        const3 = lambda t: (0, 0, 0)
        out_spec = pl.BlockSpec((B, D, tile_t), lambda t: (0, 0, t))
        dims = ("parallel",)
    else:
        nb, grid, t_axis = 1, (B, nt), 1
        x_spec = pl.BlockSpec((1, C_in, tile_t), lambda b, t: (b, 0, t))
        const2 = lambda b, t: (0, 0)
        const3 = lambda b, t: (0, 0, 0)
        out_spec = pl.BlockSpec((1, D, tile_t), lambda b, t: (b, 0, t))
        dims = ("parallel", "parallel")

    kernel = functools.partial(_latent_kernel, num_hidden_layers, D, nb,
                               t_axis, tile_t, T, mask_tail)

    out1, out2 = pl.pallas_call(
        kernel,
        out_shape=(jax.ShapeDtypeStruct((B, D, T), x.dtype),
                   jax.ShapeDtypeStruct((B, D, T), x.dtype)),
        grid_spec=pltpu.PrefetchScalarGridSpec(
            num_scalar_prefetch=0,
            grid=grid,
            in_specs=[
                x_spec,                                           # x tile
                pl.BlockSpec((H, C_in), const2),                  # W_in
                pl.BlockSpec((H, 1), const2),                     # b_in
                pl.BlockSpec((L_store, H, H), const3),            # W_hid stack
                pl.BlockSpec((L_store, H, 1), const3),            # b_hid stack
                pl.BlockSpec((2 * D, H), const2),                 # W_o fused
                pl.BlockSpec((2 * D, 1), const2),                 # b_o fused
            ],
            out_specs=[out_spec, out_spec],
        ),
        compiler_params=pltpu.CompilerParams(dimension_semantics=dims),
    )(x, w_in, b_in, w_h, b_h, w_o, b_o)
    return out1, out2


def init_params(key, tcn_dim, latent_dim_in, latent_dim_out, hidden_dim,
                num_hidden_layers, dtype=jnp.float32):
    """Deterministic synthetic params, PyTorch Conv1d(k=1) orientation (out, in)."""
    C_in = tcn_dim + latent_dim_in
    ks = jax.random.split(key, 8)
    s = 0.1
    Lp = max(num_hidden_layers, 1)
    w_in = s * jax.random.normal(ks[0], (hidden_dim, C_in), dtype)
    b_in = s * jax.random.normal(ks[1], (hidden_dim, 1), dtype)
    w_h = s * jax.random.normal(ks[2], (Lp, hidden_dim, hidden_dim), dtype)
    b_h = s * jax.random.normal(ks[3], (Lp, hidden_dim, 1), dtype)
    w_o1 = s * jax.random.normal(ks[4], (latent_dim_out, hidden_dim), dtype)
    b_o1 = s * jax.random.normal(ks[5], (latent_dim_out, 1), dtype)
    w_o2 = s * jax.random.normal(ks[6], (latent_dim_out, hidden_dim), dtype)
    b_o2 = s * jax.random.normal(ks[7], (latent_dim_out, 1), dtype)
    return (w_in, b_in, w_h, b_h, w_o1, b_o1, w_o2, b_o2)


def latent_layer_ref(x, params, num_hidden_layers):
    """Pure-JAX reference mirroring the PyTorch forward (NCT layout)."""
    (w_in, b_in, w_h, b_h, w_o1, b_o1, w_o2, b_o2) = params
    h = jnp.tanh(jnp.einsum('hc,bct->bht', w_in, x) + b_in[None])
    for l in range(num_hidden_layers):
        h = jnp.tanh(jnp.einsum('hk,bkt->bht', w_h[l], h) + b_h[l][None])
    o1 = jnp.einsum('dh,bht->bdt', w_o1, h) + b_o1[None]
    o2 = jnp.einsum('dh,bht->bdt', w_o2, h) + b_o2[None]
    return o1, o2


if __name__ == "__main__":
    # Small, shape-consistent config (C_in = tcn_dim + latent_dim_in = 32).
    tcn_dim = 24
    latent_dim_in = 8
    latent_dim_out = 16
    hidden_dim = 32
    num_hidden_layers = 2
    B, T = 2, 1000  # T not a multiple of 128 -> exercises the pad-free edge block

    key = jax.random.PRNGKey(0)
    k_x, k_p = jax.random.split(key)
    x = jax.random.normal(k_x, (B, tcn_dim + latent_dim_in, T), jnp.float32)
    params = init_params(k_p, tcn_dim, latent_dim_in, latent_dim_out,
                         hidden_dim, num_hidden_layers)
    fused = fuse_output_heads(params)   # one-time param prep (hoisted concat)

    ref1, ref2 = latent_layer_ref(x, params, num_hidden_layers)

    # Exercise both grid shapes: batch-as-grid-axis (v7x-style) and batch-folded
    # (v5e/v6e-style).  The default fold_batch=None auto-selects per device.
    for fb in (False, True):
        out1, out2 = latent_layer_pallas(
            x, fused, num_hidden_layers=num_hidden_layers, fold_batch=fb)
        out1, out2 = jax.block_until_ready((out1, out2))
        assert out1.shape == (B, latent_dim_out, T)
        assert out2.shape == (B, latent_dim_out, T)
        assert jnp.allclose(out1, ref1, atol=1e-4, rtol=1e-4), f"out1 mismatch (fold_batch={fb})"
        assert jnp.allclose(out2, ref2, atol=1e-4, rtol=1e-4), f"out2 mismatch (fold_batch={fb})"

    print("KERNEL_OK")
</pallas_src>

<mosaic_0001>
module attributes {stable_mosaic.version = 11 : i64} {
  func.func @_latent_kernel(%arg0: i32, %arg1: i32, %arg2: memref<1x32x1024xf32, #tpu.memory_space<vmem>>, %arg3: memref<32x32xf32, #tpu.memory_space<vmem>>, %arg4: memref<32x1xf32, #tpu.memory_space<vmem>>, %arg5: memref<2x32x32xf32, #tpu.memory_space<vmem>>, %arg6: memref<2x32x1xf32, #tpu.memory_space<vmem>>, %arg7: memref<32x32xf32, #tpu.memory_space<vmem>>, %arg8: memref<32x1xf32, #tpu.memory_space<vmem>>, %arg9: memref<1x16x1024xf32, #tpu.memory_space<vmem>>, %arg10: memref<1x16x1024xf32, #tpu.memory_space<vmem>>) attributes {dimension_semantics = [#tpu.dimension_semantics<parallel>, #tpu.dimension_semantics<parallel>], iteration_bounds = array<i64: 2, 1>, scalar_prefetch = 0 : i64, scratch_operands = 0 : i64, tpu.core_type = #tpu.core_type<tc>, window_params = [{transform_indices = @transform_0, window_bounds = array<i64: 1, 32, 1024>}, {pipeline_mode = #tpu.pipeline_mode<synchronous>, transform_indices = @transform_1, window_bounds = array<i64: 32, 32>}, {pipeline_mode = #tpu.pipeline_mode<synchronous>, transform_indices = @transform_2, window_bounds = array<i64: 32, 1>}, {pipeline_mode = #tpu.pipeline_mode<synchronous>, transform_indices = @transform_3, window_bounds = array<i64: 2, 32, 32>}, {pipeline_mode = #tpu.pipeline_mode<synchronous>, transform_indices = @transform_4, window_bounds = array<i64: 2, 32, 1>}, {pipeline_mode = #tpu.pipeline_mode<synchronous>, transform_indices = @transform_5, window_bounds = array<i64: 32, 32>}, {pipeline_mode = #tpu.pipeline_mode<synchronous>, transform_indices = @transform_6, window_bounds = array<i64: 32, 1>}, {transform_indices = @transform_7, window_bounds = array<i64: 1, 16, 1024>}, {transform_indices = @transform_8, window_bounds = array<i64: 1, 16, 1024>}]} {
    %0 = tpu.iota {dimensions = array<i32: 1>} : vector<1x1024xi32>
    %c1024_i32 = arith.constant 1024 : i32
    %1 = arith.muli %arg1, %c1024_i32 : i32
    %2 = vector.broadcast %1 : i32 to vector<1x1024xi32>
    %3 = arith.addi %0, %2 : vector<1x1024xi32>
    %c1000_i32 = arith.constant 1000 : i32
    %4 = vector.broadcast %c1000_i32 : i32 to vector<1x1024xi32>
    %5 = arith.cmpi slt, %3, %4 : vector<1x1024xi32>
    %c0 = arith.constant 0 : index
    %c0_0 = arith.constant 0 : index
    %c0_1 = arith.constant 0 : index
    %6 = vector.load %arg2[%c0, %c0_0, %c0_1] : memref<1x32x1024xf32, #tpu.memory_space<vmem>>, vector<1x32x1024xf32>
    %7 = vector.shape_cast %6 : vector<1x32x1024xf32> to vector<32x1024xf32>
    %cst = arith.constant 0.000000e+00 : f32
    %8 = vector.shape_cast %5 : vector<1x1024xi1> to vector<1x1024xi1>
    %9 = vector.broadcast %8 : vector<1x1024xi1> to vector<32x1024xi1>
    %10 = vector.broadcast %cst : f32 to vector<32x1024xf32>
    %11 = arith.select %9, %7, %10 : vector<32x1024xi1>, vector<32x1024xf32>
    %c0_2 = arith.constant 0 : index
    %c0_3 = arith.constant 0 : index
    %12 = vector.load %arg3[%c0_2, %c0_3] : memref<32x32xf32, #tpu.memory_space<vmem>>, vector<32x32xf32>
    %cst_4 = arith.constant dense<0.000000e+00> : vector<32x1024xf32>
    %13 = tpu.matmul %12, %11, %cst_4 {dimension_numbers = #tpu.dot_dimension_numbers<[1], [0], [0], [1], [0, 0, 1, 1], [], []>} : vector<32x32xf32>, vector<32x1024xf32>, vector<32x1024xf32> -> vector<32x1024xf32>
    %c0_5 = arith.constant 0 : index
    %c0_6 = arith.constant 0 : index
    %14 = vector.load %arg4[%c0_5, %c0_6] : memref<32x1xf32, #tpu.memory_space<vmem>>, vector<32x1xf32>
    %15 = vector.broadcast %14 : vector<32x1xf32> to vector<32x1024xf32>
    %16 = arith.addf %13, %15 : vector<32x1024xf32>
    %17 = math.tanh %16 : vector<32x1024xf32>
    %c0_7 = arith.constant 0 : index
    %c0_8 = arith.constant 0 : index
    %c0_9 = arith.constant 0 : index
    %18 = vector.load %arg5[%c0_7, %c0_8, %c0_9] : memref<2x32x32xf32, #tpu.memory_space<vmem>>, vector<1x32x32xf32>
    %19 = vector.shape_cast %18 : vector<1x32x32xf32> to vector<32x32xf32>
    %cst_10 = arith.constant dense<0.000000e+00> : vector<32x1024xf32>
    %20 = tpu.matmul %19, %17, %cst_10 {dimension_numbers = #tpu.dot_dimension_numbers<[1], [0], [0], [1], [0, 0, 1, 1], [], []>} : vector<32x32xf32>, vector<32x1024xf32>, vector<32x1024xf32> -> vector<32x1024xf32>
    %c0_11 = arith.constant 0 : index
    %c0_12 = arith.constant 0 : index
    %c0_13 = arith.constant 0 : index
    %21 = vector.load %arg6[%c0_11, %c0_12, %c0_13] : memref<2x32x1xf32, #tpu.memory_space<vmem>>, vector<1x32x1xf32>
    %22 = vector.shape_cast %21 : vector<1x32x1xf32> to vector<32x1xf32>
    %23 = vector.broadcast %22 : vector<32x1xf32> to vector<32x1024xf32>
    %24 = arith.addf %20, %23 : vector<32x1024xf32>
    %25 = math.tanh %24 : vector<32x1024xf32>
    %c1 = arith.constant 1 : index
    %c0_14 = arith.constant 0 : index
    %c0_15 = arith.constant 0 : index
    %26 = vector.load %arg5[%c1, %c0_14, %c0_15] : memref<2x32x32xf32, #tpu.memory_space<vmem>>, vector<1x32x32xf32>
    %27 = vector.shape_cast %26 : vector<1x32x32xf32> to vector<32x32xf32>
    %cst_16 = arith.constant dense<0.000000e+00> : vector<32x1024xf32>
    %28 = tpu.matmul %27, %25, %cst_16 {dimension_numbers = #tpu.dot_dimension_numbers<[1], [0], [0], [1], [0, 0, 1, 1], [], []>} : vector<32x32xf32>, vector<32x1024xf32>, vector<32x1024xf32> -> vector<32x1024xf32>
    %c1_17 = arith.constant 1 : index
    %c0_18 = arith.constant 0 : index
    %c0_19 = arith.constant 0 : index
    %29 = vector.load %arg6[%c1_17, %c0_18, %c0_19] : memref<2x32x1xf32, #tpu.memory_space<vmem>>, vector<1x32x1xf32>
    %30 = vector.shape_cast %29 : vector<1x32x1xf32> to vector<32x1xf32>
    %31 = vector.broadcast %30 : vector<32x1xf32> to vector<32x1024xf32>
    %32 = arith.addf %28, %31 : vector<32x1024xf32>
    %33 = math.tanh %32 : vector<32x1024xf32>
    %c0_20 = arith.constant 0 : index
    %c0_21 = arith.constant 0 : index
    %34 = vector.load %arg7[%c0_20, %c0_21] : memref<32x32xf32, #tpu.memory_space<vmem>>, vector<32x32xf32>
    %cst_22 = arith.constant dense<0.000000e+00> : vector<32x1024xf32>
    %35 = tpu.matmul %34, %33, %cst_22 {dimension_numbers = #tpu.dot_dimension_numbers<[1], [0], [0], [1], [0, 0, 1, 1], [], []>} : vector<32x32xf32>, vector<32x1024xf32>, vector<32x1024xf32> -> vector<32x1024xf32>
    %c0_23 = arith.constant 0 : index
    %c0_24 = arith.constant 0 : index
    %36 = vector.load %arg8[%c0_23, %c0_24] : memref<32x1xf32, #tpu.memory_space<vmem>>, vector<32x1xf32>
    %37 = vector.broadcast %36 : vector<32x1xf32> to vector<32x1024xf32>
    %38 = arith.addf %35, %37 : vector<32x1024xf32>
    %39 = vector.extract_strided_slice %38 {offsets = [0, 0], sizes = [16, 1024], strides = [1, 1]} : vector<32x1024xf32> to vector<16x1024xf32>
    %c0_25 = arith.constant 0 : index
    %c0_26 = arith.constant 0 : index
    %c0_27 = arith.constant 0 : index
    %40 = vector.load %arg9[%c0_25, %c0_26, %c0_27] : memref<1x16x1024xf32, #tpu.memory_space<vmem>>, vector<1x16x1024xf32>
    %41 = vector.shape_cast %40 : vector<1x16x1024xf32> to vector<16x1024xf32>
    %42 = vector.shape_cast %39 : vector<16x1024xf32> to vector<1x16x1024xf32>
    tpu.vector_store %arg9[%c0_25, %c0_26, %c0_27], %42 {strides = array<i32>} : memref<1x16x1024xf32, #tpu.memory_space<vmem>>, vector<1x16x1024xf32>,
    %43 = vector.extract_strided_slice %38 {offsets = [16, 0], sizes = [16, 1024], strides = [1, 1]} : vector<32x1024xf32> to vector<16x1024xf32>
    %c0_28 = arith.constant 0 : index
    %c0_29 = arith.constant 0 : index
    %c0_30 = arith.constant 0 : index
    %44 = vector.load %arg10[%c0_28, %c0_29, %c0_30] : memref<1x16x1024xf32, #tpu.memory_space<vmem>>, vector<1x16x1024xf32>
    %45 = vector.shape_cast %44 : vector<1x16x1024xf32> to vector<16x1024xf32>
    %46 = vector.shape_cast %43 : vector<16x1024xf32> to vector<1x16x1024xf32>
    tpu.vector_store %arg10[%c0_28, %c0_29, %c0_30], %46 {strides = array<i32>} : memref<1x16x1024xf32, #tpu.memory_space<vmem>>, vector<1x16x1024xf32>,
    return
  }
  func.func @transform_0(%arg0: i32, %arg1: i32) -> (i32, i32, i32) {
    %c0_i32 = arith.constant 0 : i32
    %c0_i32_0 = arith.constant 0 : i32
    return %arg0, %c0_i32, %arg1 : i32, i32, i32
  }
  func.func @transform_1(%arg0: i32, %arg1: i32) -> (i32, i32) {
    %c0_i32 = arith.constant 0 : i32
    %c0_i32_0 = arith.constant 0 : i32
    %c0_i32_1 = arith.constant 0 : i32
    return %c0_i32, %c0_i32_0 : i32, i32
  }
  func.func @transform_2(%arg0: i32, %arg1: i32) -> (i32, i32) {
    %c0_i32 = arith.constant 0 : i32
    %c0_i32_0 = arith.constant 0 : i32
    %c0_i32_1 = arith.constant 0 : i32
    return %c0_i32, %c0_i32_0 : i32, i32
  }
  func.func @transform_3(%arg0: i32, %arg1: i32) -> (i32, i32, i32) {
    %c0_i32 = arith.constant 0 : i32
    %c0_i32_0 = arith.constant 0 : i32
    %c0_i32_1 = arith.constant 0 : i32
    %c0_i32_2 = arith.constant 0 : i32
    return %c0_i32, %c0_i32_0, %c0_i32_1 : i32, i32, i32
  }
  func.func @transform_4(%arg0: i32, %arg1: i32) -> (i32, i32, i32) {
    %c0_i32 = arith.constant 0 : i32
    %c0_i32_0 = arith.constant 0 : i32
    %c0_i32_1 = arith.constant 0 : i32
    %c0_i32_2 = arith.constant 0 : i32
    return %c0_i32, %c0_i32_0, %c0_i32_1 : i32, i32, i32
  }
  func.func @transform_5(%arg0: i32, %arg1: i32) -> (i32, i32) {
    %c0_i32 = arith.constant 0 : i32
    %c0_i32_0 = arith.constant 0 : i32
    %c0_i32_1 = arith.constant 0 : i32
    return %c0_i32, %c0_i32_0 : i32, i32
  }
  func.func @transform_6(%arg0: i32, %arg1: i32) -> (i32, i32) {
    %c0_i32 = arith.constant 0 : i32
    %c0_i32_0 = arith.constant 0 : i32
    %c0_i32_1 = arith.constant 0 : i32
    return %c0_i32, %c0_i32_0 : i32, i32
  }
  func.func @transform_7(%arg0: i32, %arg1: i32) -> (i32, i32, i32) {
    %c0_i32 = arith.constant 0 : i32
    %c0_i32_0 = arith.constant 0 : i32
    return %arg0, %c0_i32, %arg1 : i32, i32, i32
  }
  func.func @transform_8(%arg0: i32, %arg1: i32) -> (i32, i32, i32) {
    %c0_i32 = arith.constant 0 : i32
    %c0_i32_0 = arith.constant 0 : i32
    return %arg0, %c0_i32, %arg1 : i32, i32, i32
  }
}

</mosaic_0001>

<llo_original>
// kernel: tpu_custom_call.1
$region0: #{tpu_custom_call.1}
  #allocation0 [shape = 'u32[]', space=smem, size = 0x4, offset = 0x4, fixed_abs, tag = 'smem constant byte address 0x4 - core index']
  #allocation1 [shape = 'u32[144,128]{1,0:T(1,128)}', space=vmem, size = 0x12000, scoped, tag = 'internal scratch']
  %s0 = inlined_call_operand.hbm [shape: f32[2,32,1000], index: 0, kind: input, shape index: {}]
  %s1 = inlined_call_operand.vmem [shape: f32[32,32], index: 1, kind: input, shape index: {}]
  %s2 = inlined_call_operand.vmem [shape: f32[32,1], index: 2, kind: input, shape index: {}]
  %s3 = inlined_call_operand.vmem [shape: f32[2,32,32], index: 3, kind: input, shape index: {}]
  %s4 = inlined_call_operand.vmem [shape: f32[2,32,1], index: 4, kind: input, shape index: {}]
  %s5 = inlined_call_operand.vmem [shape: f32[32,32], index: 5, kind: input, shape index: {}]
  %s6 = inlined_call_operand.vmem [shape: f32[32,1], index: 6, kind: input, shape index: {}]
  %s7 = inlined_call_operand.hbm [shape: f32[2,16,1000], index: 7, kind: output, shape index: {0}]
  %s8 = inlined_call_operand.hbm [shape: f32[2,16,1000], index: 8, kind: output, shape index: {1}]
  %9 = xla_tuple %s7, %s8
  %s10 = sld [smem:[#allocation0]]
  $region73: #{tpu_custom_call.1} parent=0
    _
  %s12 = ssub.s32 1, %s10
  %s13 = scalar_select 0, %s12, %s10
  $region1: #{tpu_custom_call.1} parent=0
    #allocation2 [shape = 'u8[262144]{0}', space=vmem, size = 0x40000, scoped, tag = 'input window, operand 0']
    #allocation3 [shape = 's32[2]{0}', space=sflag, size = 0x8, scoped, tag = 'scoped memory for tpu_custom_call.1']
    #allocation4 [shape = 's32[2]{0}', space=sflag, size = 0x8, scoped, tag = 'scoped memory for tpu_custom_call.1']
    #allocation5 [shape = 'u8[131072]{0}', space=vmem, size = 0x20000, scoped, tag = 'output window, operand 0']
    #allocation6 [shape = 'u8[131072]{0}', space=vmem, size = 0x20000, scoped, tag = 'output window, operand 1']
    #allocation7 [shape = 's32[2]{0}', space=sflag, size = 0x8, scoped, tag = 'scoped memory for tpu_custom_call.1']
    %14 = vsyncpa [#allocation3], 0
    %s15 = scalar_lea.sflag [#allocation3], 1
    %16 = vsyncpa %s15, 0
    %17 = vsyncpa [#allocation4], 0
    %s18 = scalar_lea.sflag [#allocation4], 1
    %19 = vsyncpa %s18, 0
    %20 = vsyncpa [#allocation7], 0
    %s21 = scalar_lea.sflag [#allocation7], 1
    %22 = vsyncpa %s21, 0
    loop: start=0, step=1, limit=4
    $region2: #{tpu_custom_call.1} parent=1 // loop_pre_header
      _
    $region3: #{tpu_custom_call.1} parent=1 // loop_header
      %s24 = sphi 0, %s28
      %p25 = scmp.ge.s32.totalorder %s24, 4
      %s31 = sphi 0, %s43
      %s32 = sphi 0, %s39
      %s33 = sphi 0, %s31
      %s34 = sphi 0, %s32
      %s35 = sphi 0, %s33
      %s36 = sphi 0, %s34
      %s48 = sphi 0, %s50
      %s51 = sphi 0, %s48
      %s52 = sphi 0, %s51
      %s68 = sphi 0, %s52
      %s72 = sphi 0, %s72
      %s74 = sphi 0, %s72
      %s75 = sphi 0, %s74
      %s89 = sphi 0, %s75
      %s93 = sphi 0, %s93
      %s95 = sphi 0, %s93
      %s96 = sphi 0, %s95
      %s110 = sphi 0, %s96
      %s114 = sphi 0, %s114
      %s116 = sphi 0, %s114
      %s117 = sphi 0, %s116
      %s131 = sphi 0, %s117
      %s135 = sphi 0, %s135
      %s137 = sphi 0, %s135
      %s138 = sphi 0, %s137
      %s152 = sphi 0, %s138
      %s156 = sphi 0, %s156
      %s158 = sphi 0, %s156
      %s159 = sphi 0, %s158
      %s173 = sphi 0, %s159
      %s177 = sphi 0, %s177
      %s179 = sphi 0, %s177
      %s180 = sphi 0, %s179
      %s194 = sphi 0, %s180
      %s202 = sphi 0, %s204
      %s205 = sphi 0, %s202
      %s206 = sphi 0, %s205
      %s222 = sphi 0, %s206
      %s230 = sphi 0, %s232
      %s233 = sphi 0, %s230
      %s234 = sphi 0, %s233
      %s250 = sphi 0, %s234
    $region4: #{tpu_custom_call.1} parent=1 // loop_header_branch
      %27 = sbr.rel (%p25) target = $region8
    $region5: #{tpu_custom_call.1} parent=1 // loop_body
      %s29 = ssub.s32 %s24, 1
      %s30 = ssub.s32 %s24, 2
      %s37 = sadd.s32 1, %s32
      %p38 = scmp.ge.s32.totalorder %s37, 1
      %s39 = scalar_select %p38, 0, %s37
      %s40 = sadd.s32 1, %s31
      %s41 = scalar_select %p38, %s40, %s31
      %p42 = scmp.ge.s32.totalorder %s41, 2
      %s43 = scalar_select %p42, 0, %s41
      %s44 = ssub.s32 %s31, %s43
      %s45 = ssub.s32 %s32, %s39
      %s46 = sor.u32 %s44, %s45
      %p47 = scmp.eq.s32.totalorder %s46, 0
      %s49 = sadd.s32 %s48, 1
      %s50 = scalar_select %p47, %s48, %s49
      %p53 = pneg %p47
      %p54 = scmp.eq.s32.totalorder %s24, 1
      %p55 = por %p53, %p54
      %p56 = scmp.ne.s32.totalorder %s48, %s51
      %p57 = scmp.eq.s32.totalorder %s24, 0
      %p58 = por %p56, %p57
      %p59 = scmp.ne.s32.totalorder %s48, %s51
      %p60 = scmp.eq.s32.totalorder %s29, 1
      %p61 = por %p59, %p60
      %p62 = scmp.ne.s32.totalorder %s51, %s52
      %p63 = scmp.eq.s32.totalorder %s29, 0
      %p64 = por %p62, %p63
      %p65 = scmp.ne.s32.totalorder %s51, %s52
      %p66 = scmp.eq.s32.totalorder %s30, 1
      %p67 = por %p65, %p66
      %p69 = scmp.ne.s32.totalorder %s52, %s68
      %p70 = scmp.eq.s32.totalorder %s30, 0
      %p71 = por %p69, %p70
      %s73 = sadd.s32 %s72, 1
      %p76 = scmp.eq.s32.totalorder %s24, 1
      %p77 = scmp.ne.s32.totalorder %s72, %s74
      %p78 = scmp.eq.s32.totalorder %s24, 0
      %p79 = por %p77, %p78
      %p80 = scmp.ne.s32.totalorder %s72, %s74
      %p81 = scmp.eq.s32.totalorder %s29, 1
      %p82 = por %p80, %p81
      %p83 = scmp.ne.s32.totalorder %s74, %s75
      %p84 = scmp.eq.s32.totalorder %s29, 0
      %p85 = por %p83, %p84
      %p86 = scmp.ne.s32.totalorder %s74, %s75
      %p87 = scmp.eq.s32.totalorder %s30, 1
      %p88 = por %p86, %p87
      %p90 = scmp.ne.s32.totalorder %s75, %s89
      %p91 = scmp.eq.s32.totalorder %s30, 0
      %p92 = por %p90, %p91
      %s94 = sadd.s32 %s93, 1
      %p97 = scmp.eq.s32.totalorder %s24, 1
      %p98 = scmp.ne.s32.totalorder %s93, %s95
      %p99 = scmp.eq.s32.totalorder %s24, 0
      %p100 = por %p98, %p99
      %p101 = scmp.ne.s32.totalorder %s93, %s95
      %p102 = scmp.eq.s32.totalorder %s29, 1
      %p103 = por %p101, %p102
      %p104 = scmp.ne.s32.totalorder %s95, %s96
      %p105 = scmp.eq.s32.totalorder %s29, 0
      %p106 = por %p104, %p105
      %p107 = scmp.ne.s32.totalorder %s95, %s96
      %p108 = scmp.eq.s32.totalorder %s30, 1
      %p109 = por %p107, %p108
      %p111 = scmp.ne.s32.totalorder %s96, %s110
      %p112 = scmp.eq.s32.totalorder %s30, 0
      %p113 = por %p111, %p112
      %s115 = sadd.s32 %s114, 1
      %p118 = scmp.eq.s32.totalorder %s24, 1
      %p119 = scmp.ne.s32.totalorder %s114, %s116
      %p120 = scmp.eq.s32.totalorder %s24, 0
      %p121 = por %p119, %p120
      %p122 = scmp.ne.s32.totalorder %s114, %s116
      %p123 = scmp.eq.s32.totalorder %s29, 1
      %p124 = por %p122, %p123
      %p125 = scmp.ne.s32.totalorder %s116, %s117
      %p126 = scmp.eq.s32.totalorder %s29, 0
      %p127 = por %p125, %p126
      %p128 = scmp.ne.s32.totalorder %s116, %s117
      %p129 = scmp.eq.s32.totalorder %s30, 1
      %p130 = por %p128, %p129
      %p132 = scmp.ne.s32.totalorder %s117, %s131
      %p133 = scmp.eq.s32.totalorder %s30, 0
      %p134 = por %p132, %p133
      %s136 = sadd.s32 %s135, 1
      %p139 = scmp.eq.s32.totalorder %s24, 1
      %p140 = scmp.ne.s32.totalorder %s135, %s137
      %p141 = scmp.eq.s32.totalorder %s24, 0
      %p142 = por %p140, %p141
      %p143 = scmp.ne.s32.totalorder %s135, %s137
      %p144 = scmp.eq.s32.totalorder %s29, 1
      %p145 = por %p143, %p144
      %p146 = scmp.ne.s32.totalorder %s137, %s138
      %p147 = scmp.eq.s32.totalorder %s29, 0
      %p148 = por %p146, %p147
      %p149 = scmp.ne.s32.totalorder %s137, %s138
      %p150 = scmp.eq.s32.totalorder %s30, 1
      %p151 = por %p149, %p150
      %p153 = scmp.ne.s32.totalorder %s138, %s152
      %p154 = scmp.eq.s32.totalorder %s30, 0
      %p155 = por %p153, %p154
      %s157 = sadd.s32 %s156, 1
      %p160 = scmp.eq.s32.totalorder %s24, 1
      %p161 = scmp.ne.s32.totalorder %s156, %s158
      %p162 = scmp.eq.s32.totalorder %s24, 0
      %p163 = por %p161, %p162
      %p164 = scmp.ne.s32.totalorder %s156, %s158
      %p165 = scmp.eq.s32.totalorder %s29, 1
      %p166 = por %p164, %p165
      %p167 = scmp.ne.s32.totalorder %s158, %s159
      %p168 = scmp.eq.s32.totalorder %s29, 0
      %p169 = por %p167, %p168
      %p170 = scmp.ne.s32.totalorder %s158, %s159
      %p171 = scmp.eq.s32.totalorder %s30, 1
      %p172 = por %p170, %p171
      %p174 = scmp.ne.s32.totalorder %s159, %s173
      %p175 = scmp.eq.s32.totalorder %s30, 0
      %p176 = por %p174, %p175
      %s178 = sadd.s32 %s177, 1
      %p181 = scmp.eq.s32.totalorder %s24, 1
      %p182 = scmp.ne.s32.totalorder %s177, %s179
      %p183 = scmp.eq.s32.totalorder %s24, 0
      %p184 = por %p182, %p183
      %p185 = scmp.ne.s32.totalorder %s177, %s179
      %p186 = scmp.eq.s32.totalorder %s29, 1
      %p187 = por %p185, %p186
      %p188 = scmp.ne.s32.totalorder %s179, %s180
      %p189 = scmp.eq.s32.totalorder %s29, 0
      %p190 = por %p188, %p189
      %p191 = scmp.ne.s32.totalorder %s179, %s180
      %p192 = scmp.eq.s32.totalorder %s30, 1
      %p193 = por %p191, %p192
      %p195 = scmp.ne.s32.totalorder %s180, %s194
      %p196 = scmp.eq.s32.totalorder %s30, 0
      %p197 = por %p195, %p196
      %s198 = ssub.s32 %s31, %s43
      %s199 = ssub.s32 %s32, %s39
      %s200 = sor.u32 %s198, %s199
      %p201 = scmp.eq.s32.totalorder %s200, 0
      %s203 = sadd.s32 %s202, 1
      %s204 = scalar_select %p201, %s202, %s203
      %p207 = pneg %p201
      %p208 = scmp.eq.s32.totalorder %s24, 1
      %p209 = por %p207, %p208
      %p210 = scmp.ne.s32.totalorder %s202, %s205
      %p211 = scmp.eq.s32.totalorder %s24, 0
      %p212 = por %p210, %p211
      %p213 = scmp.ne.s32.totalorder %s202, %s205
      %p214 = scmp.eq.s32.totalorder %s29, 1
      %p215 = por %p213, %p214
      %p216 = scmp.ne.s32.totalorder %s205, %s206
      %p217 = scmp.eq.s32.totalorder %s29, 0
      %p218 = por %p216, %p217
      %p219 = scmp.ne.s32.totalorder %s205, %s206
      %p220 = scmp.eq.s32.totalorder %s30, 1
      %p221 = por %p219, %p220
      %p223 = scmp.ne.s32.totalorder %s206, %s222
      %p224 = scmp.eq.s32.totalorder %s30, 0
      %p225 = por %p223, %p224
      %s226 = ssub.s32 %s31, %s43
      %s227 = ssub.s32 %s32, %s39
      %s228 = sor.u32 %s226, %s227
      %p229 = scmp.eq.s32.totalorder %s228, 0
      %s231 = sadd.s32 %s230, 1
      %s232 = scalar_select %p229, %s230, %s231
      %p235 = pneg %p229
      %p236 = scmp.eq.s32.totalorder %s24, 1
      %p237 = por %p235, %p236
      %p238 = scmp.ne.s32.totalorder %s230, %s233
      %p239 = scmp.eq.s32.totalorder %s24, 0
      %p240 = por %p238, %p239
      %p241 = scmp.ne.s32.totalorder %s230, %s233
      %p242 = scmp.eq.s32.totalorder %s29, 1
      %p243 = por %p241, %p242
      %p244 = scmp.ne.s32.totalorder %s233, %s234
      %p245 = scmp.eq.s32.totalorder %s29, 0
      %p246 = por %p244, %p245
      %p247 = scmp.ne.s32.totalorder %s233, %s234
      %p248 = scmp.eq.s32.totalorder %s30, 1
      %p249 = por %p247, %p248
      %p251 = scmp.ne.s32.totalorder %s234, %s250
      %p252 = scmp.eq.s32.totalorder %s30, 0
      %p253 = por %p251, %p252
      %p254 = scmp.le.s32.totalorder 1, %s24
      %p255 = scmp.lt.s32.totalorder %s24, 3
      %p256 = pnand %p254, %p255
      %p257 = pneg %p256
      // Predicated region
      $region9: #{tpu_custom_call.1} parent=5 // pred_check
        _
      $region10: #{tpu_custom_call.1} parent=5 // pred_check_branch
        %259 = sbr.rel (%p256) target = $region12
      $region11: #{tpu_custom_call.1} parent=5 // pred_region
        %s260 = ssub.s32 %s24, 1
        // Predicated region
        $region13: #{tpu_custom_call.1} parent=11 // pred_check
          %p261 = pneg %p85
        $region14: #{tpu_custom_call.1} parent=11 // pred_check_branch
          %263 = sbr.rel (%p261) target = $region16
        $region15: #{tpu_custom_call.1} parent=11 // pred_region
          _
        $region16: #{tpu_custom_call.1} parent=11 // pred_fallthru
          _
        // Predicated region
        $region17: #{tpu_custom_call.1} parent=11 // pred_check
          %p264 = pneg %p106
        $region18: #{tpu_custom_call.1} parent=11 // pred_check_branch
          %266 = sbr.rel (%p264) target = $region20
        $region19: #{tpu_custom_call.1} parent=11 // pred_region
          _
        $region20: #{tpu_custom_call.1} parent=11 // pred_fallthru
          _
        // Predicated region
        $region21: #{tpu_custom_call.1} parent=11 // pred_check
          %p267 = pneg %p127
        $region22: #{tpu_custom_call.1} parent=11 // pred_check_branch
          %269 = sbr.rel (%p267) target = $region24
        $region23: #{tpu_custom_call.1} parent=11 // pred_region
          _
        $region24: #{tpu_custom_call.1} parent=11 // pred_fallthru
          _
        // Predicated region
        $region25: #{tpu_custom_call.1} parent=11 // pred_check
          %p270 = pneg %p148
        $region26: #{tpu_custom_call.1} parent=11 // pred_check_branch
          %272 = sbr.rel (%p270) target = $region28
        $region27: #{tpu_custom_call.1} parent=11 // pred_region
          _
        $region28: #{tpu_custom_call.1} parent=11 // pred_fallthru
          _
        // Predicated region
        $region29: #{tpu_custom_call.1} parent=11 // pred_check
          %p273 = pneg %p169
        $region30: #{tpu_custom_call.1} parent=11 // pred_check_branch
          %275 = sbr.rel (%p273) target = $region32
        $region31: #{tpu_custom_call.1} parent=11 // pred_region
          _
        $region32: #{tpu_custom_call.1} parent=11 // pred_fallthru
          _
        // Predicated region
        $region33: #{tpu_custom_call.1} parent=11 // pred_check
          %p276 = pneg %p190
        $region34: #{tpu_custom_call.1} parent=11 // pred_check_branch
          %278 = sbr.rel (%p276) target = $region36
        $region35: #{tpu_custom_call.1} parent=11 // pred_region
          _
        $region36: #{tpu_custom_call.1} parent=11 // pred_fallthru
          _
      $region12: #{tpu_custom_call.1} parent=5 // pred_fallthru
        _
      %p279 = scmp.lt.s32.totalorder %s24, 2
      // Predicated region
      $region37: #{tpu_custom_call.1} parent=5 // pred_check
        %p280 = pneg %p279
      $region38: #{tpu_custom_call.1} parent=5 // pred_check_branch
        %282 = sbr.rel (%p280) target = $region40
      $region39: #{tpu_custom_call.1} parent=5 // pred_region
        // Predicated region
        $region41: #{tpu_custom_call.1} parent=39 // pred_check
          %p283 = pneg %p58
        $region42: #{tpu_custom_call.1} parent=39 // pred_check_branch
          %285 = sbr.rel (%p283) target = $region44
        $region43: #{tpu_custom_call.1} parent=39 // pred_region
          %s286 = sand.u32 %s48, 1
          %s287 = scalar_lea.sflag [#allocation3], %s286
          %s288 = sand.u32 %s48, 1
          %s289 = smul.addr %s288, 256
          %s290 = scalar_lea.vmem [#allocation2], %s289
          %s291 = smul.u32 8, %s32
          %s293 = ssub.s32 4096, 4096
          %294 = vsyncadd %s287, %s293
          %s295 = smul.addr %s31, 32
          %s296 = sadd.s32 %s291, %s295
          %s297 = smul.addr %s296, 128
          %s298 = scalar_lea.hbm %s0, %s297
          %s299 = sshll.u32 %s290, 4
          %s300 = int_to_ptr.vmem [resolvable:$true] %s299
          %305 = dma.hbm_to_vmem [thread:$0]  %s298, 4096, %s300, %s287, 1024, 1024, 64
        $region44: #{tpu_custom_call.1} parent=39 // pred_fallthru
          _
      $region40: #{tpu_custom_call.1} parent=5 // pred_fallthru
        _
      %p306 = scmp.le.s32.totalorder 1, %s24
      %p307 = scmp.lt.s32.totalorder %s24, 3
      %p308 = pnand %p306, %p307
      %p309 = pneg %p308
      // Predicated region
      $region45: #{tpu_custom_call.1} parent=5 // pred_check
        _
      $region46: #{tpu_custom_call.1} parent=5 // pred_check_branch
        %311 = sbr.rel (%p308) target = $region48
      $region47: #{tpu_custom_call.1} parent=5 // pred_region
        %s312 = ssub.s32 %s24, 1
        %s313 = sand.u32 %s51, 1
        %s314 = scalar_lea.sflag [#allocation3], %s313
        %s315 = sand.u32 %s51, 1
        %s316 = smul.addr %s315, 256
        %s317 = scalar_lea.vmem [#allocation2], %s316
        // Predicated region
        $region49: #{tpu_custom_call.1} parent=47 // pred_check
          %p318 = pneg %p64
        $region50: #{tpu_custom_call.1} parent=47 // pred_check_branch
          %320 = sbr.rel (%p318) target = $region52
        $region51: #{tpu_custom_call.1} parent=47 // pred_region
          %321 = dma.done %s314, 4096
        $region52: #{tpu_custom_call.1} parent=47 // pred_fallthru
          _
        %s322 = sand.u32 %s51, 1
        %s323 = scalar_lea.sflag [#allocation3], %s322
        %s324 = sand.u32 %s51, 1
        %s325 = smul.addr %s324, 256
        %s326 = scalar_lea.vmem [#allocation2], %s325
        %p327 = pneg %p64
        %p328 = pneg %p61
        %p329 = pneg %p85
        %p330 = pneg %p82
        %p331 = pneg %p106
        %p332 = pneg %p103
        %p333 = pneg %p127
        %p334 = pneg %p124
        %p335 = pneg %p148
        %p336 = pneg %p145
        %p337 = pneg %p169
        %p338 = pneg %p166
        %p339 = pneg %p190
        %p340 = pneg %p187
        %p341 = pneg %p218
        %p342 = pneg %p215
        %s343 = sand.u32 %s205, 1
        %s344 = scalar_lea.sflag [#allocation4], %s343
        %s345 = sand.u32 %s205, 1
        %s346 = smul.addr %s345, 128
        %s347 = scalar_lea.vmem [#allocation5], %s346
        %p348 = pneg %p246
        %p349 = pneg %p243
        %s350 = sand.u32 %s233, 1
        %s351 = scalar_lea.sflag [#allocation7], %s350
        %s352 = sand.u32 %s233, 1
        %s353 = smul.addr %s352, 128
        %s354 = scalar_lea.vmem [#allocation6], %s353
        %s355 = smul.u32 8, %s34
        %s356 = smul.u32 8, %s34
        %s357 = smul.u32 8, %s34
        %v358 = vlaneseq
        %v359 = vand.u32 %v358, 127
        %v360 = vadd.s32 %v359, 128
        %v361 = vadd.s32 %v359, 256
        %v362 = vadd.s32 %v359, 384
        %v363 = vadd.s32 %v359, 512
        %v364 = vadd.s32 %v359, 640
        %v365 = vadd.s32 %v359, 768
        %v366 = vadd.s32 %v359, 896
        %s367 = smul.u32 %s34, 1024
        %v368 = vstv %s367
        %v369 = vadd.s32 %v359, %v368
        %v370 = vadd.s32 %v360, %v368
        %v371 = vadd.s32 %v361, %v368
        %v372 = vadd.s32 %v362, %v368
        %v373 = vadd.s32 %v363, %v368
        %v374 = vadd.s32 %v364, %v368
        %v375 = vadd.s32 %v365, %v368
        %v376 = vadd.s32 %v366, %v368
        %vm377 = vcmp.lt.s32.totalorder %v369, 1000
        %vm378 = vcmp.lt.s32.totalorder %v370, 1000
        %vm379 = vcmp.lt.s32.totalorder %v371, 1000
        %vm380 = vcmp.lt.s32.totalorder %v372, 1000
        %vm381 = vcmp.lt.s32.totalorder %v373, 1000
        %vm382 = vcmp.lt.s32.totalorder %v374, 1000
        %vm383 = vcmp.lt.s32.totalorder %v375, 1000
        %vm384 = vcmp.lt.s32.totalorder %v376, 1000
        %v385 = vld [vmem:[%s317] sm:$0xff]
        %v386 = vld [vmem:[%s317 + $0x8] sm:$0xff]
        %v387 = vld [vmem:[%s317 + $0x10] sm:$0xff]
        %v388 = vld [vmem:[%s317 + $0x18] sm:$0xff]
        %v389 = vld [vmem:[%s317 + $0x20] sm:$0xff]
        %v390 = vld [vmem:[%s317 + $0x28] sm:$0xff]
        %v391 = vld [vmem:[%s317 + $0x30] sm:$0xff]
        %v392 = vld [vmem:[%s317 + $0x38] sm:$0xff]
        %v393 = vld [vmem:[%s317 + $0x40] sm:$0xff]
        %v394 = vld [vmem:[%s317 + $0x48] sm:$0xff]
        %v395 = vld [vmem:[%s317 + $0x50] sm:$0xff]
        %v396 = vld [vmem:[%s317 + $0x58] sm:$0xff]
        %v397 = vld [vmem:[%s317 + $0x60] sm:$0xff]
        %v398 = vld [vmem:[%s317 + $0x68] sm:$0xff]
        %v399 = vld [vmem:[%s317 + $0x70] sm:$0xff]
        %v400 = vld [vmem:[%s317 + $0x78] sm:$0xff]
        %v401 = vld [vmem:[%s317 + $0x80] sm:$0xff]
        %v402 = vld [vmem:[%s317 + $0x88] sm:$0xff]
        %v403 = vld [vmem:[%s317 + $0x90] sm:$0xff]
        %v404 = vld [vmem:[%s317 + $0x98] sm:$0xff]
        %v405 = vld [vmem:[%s317 + $0xa0] sm:$0xff]
        %v406 = vld [vmem:[%s317 + $0xa8] sm:$0xff]
        %v407 = vld [vmem:[%s317 + $0xb0] sm:$0xff]
        %v408 = vld [vmem:[%s317 + $0xb8] sm:$0xff]
        %v409 = vld [vmem:[%s317 + $0xc0] sm:$0xff]
        %v410 = vld [vmem:[%s317 + $0xc8] sm:$0xff]
        %v411 = vld [vmem:[%s317 + $0xd0] sm:$0xff]
        %v412 = vld [vmem:[%s317 + $0xd8] sm:$0xff]
        %v413 = vld [vmem:[%s317 + $0xe0] sm:$0xff]
        %v414 = vld [vmem:[%s317 + $0xe8] sm:$0xff]
        %v415 = vld [vmem:[%s317 + $0xf0] sm:$0xff]
        %v416 = vld [vmem:[%s317 + $0xf8] sm:$0xff]
        %v417 = vsel %vm377, 1, 0
        %v418 = vsel %vm378, 1, 0
        %v419 = vsel %vm379, 1, 0
        %v420 = vsel %vm380, 1, 0
        %v421 = vsel %vm381, 1, 0
        %v422 = vsel %vm382, 1, 0
        %v423 = vsel %vm383, 1, 0
        %v424 = vsel %vm384, 1, 0
        %vm425 = vcmp.eq.s32.totalorder %v417, 1
        %vm426 = vcmp.eq.s32.totalorder %v418, 1
        %vm427 = vcmp.eq.s32.totalorder %v419, 1
        %vm428 = vcmp.eq.s32.totalorder %v420, 1
        %vm429 = vcmp.eq.s32.totalorder %v421, 1
        %vm430 = vcmp.eq.s32.totalorder %v422, 1
        %vm431 = vcmp.eq.s32.totalorder %v423, 1
        %vm432 = vcmp.eq.s32.totalorder %v424, 1
        %v433 = vsel %vm425, %v385, 0.0
        %v434 = vsel %vm426, %v386, 0.0
        %v435 = vsel %vm427, %v387, 0.0
        %v436 = vsel %vm428, %v388, 0.0
        %v437 = vsel %vm429, %v389, 0.0
        %v438 = vsel %vm430, %v390, 0.0
        %v439 = vsel %vm431, %v391, 0.0
        %v440 = vsel %vm432, %v392, 0.0
        %v441 = vsel %vm425, %v393, 0.0
        %v442 = vsel %vm426, %v394, 0.0
        %v443 = vsel %vm427, %v395, 0.0
        %v444 = vsel %vm428, %v396, 0.0
        %v445 = vsel %vm429, %v397, 0.0
        %v446 = vsel %vm430, %v398, 0.0
        %v447 = vsel %vm431, %v399, 0.0
        %v448 = vsel %vm432, %v400, 0.0
        %v449 = vsel %vm425, %v401, 0.0
        %v450 = vsel %vm426, %v402, 0.0
        %v451 = vsel %vm427, %v403, 0.0
        %v452 = vsel %vm428, %v404, 0.0
        %v453 = vsel %vm429, %v405, 0.0
        %v454 = vsel %vm430, %v406, 0.0
        %v455 = vsel %vm431, %v407, 0.0
        %v456 = vsel %vm432, %v408, 0.0
        %v457 = vsel %vm425, %v409, 0.0
        %v458 = vsel %vm426, %v410, 0.0
        %v459 = vsel %vm427, %v411, 0.0
        %v460 = vsel %vm428, %v412, 0.0
        %v461 = vsel %vm429, %v413, 0.0
        %v462 = vsel %vm430, %v414, 0.0
        %v463 = vsel %vm431, %v415, 0.0
        %v464 = vsel %vm432, %v416, 0.0
        %v465 = vld [vmem:[%s1] sm:$0xff]
        %v466 = vld [vmem:[%s1 + $0x8] sm:$0xff]
        %v467 = vld [vmem:[%s1 + $0x10] sm:$0xff]
        %v468 = vld [vmem:[%s1 + $0x18] sm:$0xff]
        %v469 = vld [vmem:[%s2] sm:$0xff]
        %v470 = vld [vmem:[%s2 + $0x8] sm:$0xff]
        %v471 = vld [vmem:[%s2 + $0x10] sm:$0xff]
        %v472 = vld [vmem:[%s2 + $0x18] sm:$0xff]
        %474 = vset.pattern.permute.xlu0 0
        %475 = vperm.xlu0 %474, %v469
        %v476 = vpop.permute.xlu0 %475
        %479 = vset.pattern.permute.xlu0 0
        %480 = vperm.xlu0 %479, %v470
        %v481 = vpop.permute.xlu0 %480
        %484 = vset.pattern.permute.xlu0 0
        %485 = vperm.xlu0 %484, %v471
        %v486 = vpop.permute.xlu0 %485
        %489 = vset.pattern.permute.xlu0 0
        %490 = vperm.xlu0 %489, %v472
        %v491 = vpop.permute.xlu0 %490
        %vm493 = vcmask 261120
        %v495 = vsel %vm493, %v465, 0
        %v498 = vsel %vm493, %v466, 0
        %v501 = vsel %vm493, %v467, 0
        %v504 = vsel %vm493, %v468, 0
        %506 = vmatprep.subr.mxu0 %v434
        %507 = vmatpush1.msra.mxu0 %v433
        %508 = vmatprep.subr.mxu0 %v442
        %509 = vmatpush1.msra.mxu0 %v441
        %510 = vmatprep.subr.mxu0 %v450
        %511 = vmatpush1.msra.mxu0 %v449
        %512 = vmatprep.subr.mxu0 %v458
        %513 = vmatpush1.msra.mxu0 %v457
        %514 = vmatprep.subr.mxu0 0.0
        %515 = vmatpush1.msra.mxu0 0.0
        %516 = vmatprep.subr.mxu0 0.0
        %517 = vmatpush1.msra.mxu0 0.0
        %518 = vmatprep.subr.mxu0 0.0
        %519 = vmatpush1.msra.mxu0 0.0
        %520 = vmatprep.subr.mxu0 0.0
        %521 = vmatpush1.msra.mxu0 0.0
        %522 = vmatprep.subr.mxu0 0.0
        %523 = vmatpush1.msra.mxu0 0.0
        %524 = vmatprep.subr.mxu0 0.0
        %525 = vmatpush1.msra.mxu0 0.0
        %526 = vmatprep.subr.mxu0 0.0
        %527 = vmatpush1.msra.mxu0 0.0
        %528 = vmatprep.subr.mxu0 0.0
        %529 = vmatpush1.msra.mxu0 0.0
        %530 = vmatprep.subr.mxu0 0.0
        %531 = vmatpush1.msra.mxu0 0.0
        %532 = vmatprep.subr.mxu0 0.0
        %533 = vmatpush1.msra.mxu0 0.0
        %534 = vmatprep.subr.mxu0 0.0
        %535 = vmatpush1.msra.mxu0 0.0
        %536 = vmatprep.subr.mxu0 0.0
        %537 = vmatpush1.msra.mxu0 0.0
        %538 = vmatprep.subr.mxu0 0.0
        %539 = vmatpush1.msra.mxu0 0.0
        %540 = vmatprep.subr.mxu0 0.0
        %541 = vmatpush1.msra.mxu0 0.0
        %542 = vmatprep.subr.mxu0 0.0
        %543 = vmatpush1.msra.mxu0 0.0
        %544 = vmatprep.subr.mxu0 0.0
        %545 = vmatpush1.msra.mxu0 0.0
        %546 = vmatprep.subr.mxu0 0.0
        %547 = vmatpush1.msra.mxu0 0.0
        %548 = vmatprep.subr.mxu0 0.0
        %549 = vmatpush1.msra.mxu0 0.0
        %550 = vmatprep.subr.mxu0 0.0
        %551 = vmatpush1.msra.mxu0 0.0
        %552 = vmatprep.subr.mxu0 0.0
        %553 = vmatpush1.msra.mxu0 0.0
        %554 = vmatprep.subr.mxu0 0.0
        %555 = vmatpush1.msra.mxu0 0.0
        %556 = vmatprep.subr.mxu0 0.0
        %557 = vmatpush1.msra.mxu0 0.0
        %558 = vmatprep.subr.mxu0 0.0
        %559 = vmatpush1.msra.mxu0 0.0
        %560 = vmatprep.subr.mxu0 0.0
        %561 = vmatpush1.msra.mxu0 0.0
        %562 = vmatprep.subr.mxu0 0.0
        %563 = vmatpush1.msra.mxu0 0.0
        %564 = vmatprep.subr.mxu0 0.0
        %565 = vmatpush1.msra.mxu0 0.0
        %566 = vmatprep.subr.mxu0 0.0
        %567 = vmatpush1.msra.mxu0 0.0
        %568 = vmatprep.subr.mxu0 0.0
        %569 = vmatpush1.msra.mxu0 0.0
        %570 = vmatprep.mubr.f32.mxu0 0.0
        %571 = vmatmul.mubr.f32.gmra.mrb[0].mxu0 %v495
        %v572 = vpop.f32.mrb[0].mxu0
        %v573 = vadd.f32 %v476, %v572
        %v574 = vpop.f32.mrb[0].mxu0
        %v575 = vadd.f32 %v476, %v574
        %576 = vmatprep.mubr.f32.mxu0 0.0
        %577 = vmatmul.mubr.f32.gmra.mrb[0].mxu0 %v498
        %v578 = vpop.f32.mrb[0].mxu0
        %v579 = vadd.f32 %v481, %v578
        %v580 = vpop.f32.mrb[0].mxu0
        %v581 = vadd.f32 %v481, %v580
        %582 = vmatprep.mubr.f32.mxu0 0.0
        %583 = vmatmul.mubr.f32.gmra.mrb[0].mxu0 %v501
        %v584 = vpop.f32.mrb[0].mxu0
        %v585 = vadd.f32 %v486, %v584
        %v586 = vpop.f32.mrb[0].mxu0
        %v587 = vadd.f32 %v486, %v586
        %588 = vmatprep.mubr.f32.mxu0 0.0
        %589 = vmatmul.mubr.f32.gmra.mrb[0].mxu0 %v504
        %v590 = vpop.f32.mrb[0].mxu0
        %v591 = vadd.f32 %v491, %v590
        %v592 = vpop.f32.mrb[0].mxu0
        %v593 = vadd.f32 %v491, %v592
        %594 = vdwg.mxu0
        %595 = vmatprep.subr.mxu0 %v436
        %596 = vmatpush1.msra.mxu0 %v435
        %597 = vmatprep.subr.mxu0 %v444
        %598 = vmatpush1.msra.mxu0 %v443
        %599 = vmatprep.subr.mxu0 %v452
        %600 = vmatpush1.msra.mxu0 %v451
        %601 = vmatprep.subr.mxu0 %v460
        %602 = vmatpush1.msra.mxu0 %v459
        %603 = vmatprep.subr.mxu0 0.0
        %604 = vmatpush1.msra.mxu0 0.0
        %605 = vmatprep.subr.mxu0 0.0
        %606 = vmatpush1.msra.mxu0 0.0
        %607 = vmatprep.subr.mxu0 0.0
        %608 = vmatpush1.msra.mxu0 0.0
        %609 = vmatprep.subr.mxu0 0.0
        %610 = vmatpush1.msra.mxu0 0.0
        %611 = vmatprep.subr.mxu0 0.0
        %612 = vmatpush1.msra.mxu0 0.0
        %613 = vmatprep.subr.mxu0 0.0
        %614 = vmatpush1.msra.mxu0 0.0
        %615 = vmatprep.subr.mxu0 0.0
        %616 = vmatpush1.msra.mxu0 0.0
        %617 = vmatprep.subr.mxu0 0.0
        %618 = vmatpush1.msra.mxu0 0.0
        %619 = vmatprep.subr.mxu0 0.0
        %620 = vmatpush1.msra.mxu0 0.0
        %621 = vmatprep.subr.mxu0 0.0
        %622 = vmatpush1.msra.mxu0 0.0
        %623 = vmatprep.subr.mxu0 0.0
        %624 = vmatpush1.msra.mxu0 0.0
        %625 = vmatprep.subr.mxu0 0.0
        %626 = vmatpush1.msra.mxu0 0.0
        %627 = vmatprep.subr.mxu0 0.0
        %628 = vmatpush1.msra.mxu0 0.0
        %629 = vmatprep.subr.mxu0 0.0
        %630 = vmatpush1.msra.mxu0 0.0
        %631 = vmatprep.subr.mxu0 0.0
        %632 = vmatpush1.msra.mxu0 0.0
        %633 = vmatprep.subr.mxu0 0.0
        %634 = vmatpush1.msra.mxu0 0.0
        %635 = vmatprep.subr.mxu0 0.0
        %636 = vmatpush1.msra.mxu0 0.0
        %637 = vmatprep.subr.mxu0 0.0
        %638 = vmatpush1.msra.mxu0 0.0
        %639 = vmatprep.subr.mxu0 0.0
        %640 = vmatpush1.msra.mxu0 0.0
        %641 = vmatprep.subr.mxu0 0.0
        %642 = vmatpush1.msra.mxu0 0.0
        %643 = vmatprep.subr.mxu0 0.0
        %644 = vmatpush1.msra.mxu0 0.0
        %645 = vmatprep.subr.mxu0 0.0
        %646 = vmatpush1.msra.mxu0 0.0
        %647 = vmatprep.subr.mxu0 0.0
        %648 = vmatpush1.msra.mxu0 0.0
        %649 = vmatprep.subr.mxu0 0.0
        %650 = vmatpush1.msra.mxu0 0.0
        %651 = vmatprep.subr.mxu0 0.0
        %652 = vmatpush1.msra.mxu0 0.0
        %653 = vmatprep.subr.mxu0 0.0
        %654 = vmatpush1.msra.mxu0 0.0
        %655 = vmatprep.subr.mxu0 0.0
        %656 = vmatpush1.msra.mxu0 0.0
        %657 = vmatprep.subr.mxu0 0.0
        %658 = vmatpush1.msra.mxu0 0.0
        %659 = vmatprep.mubr.f32.mxu0 0.0
        %660 = vmatmul.mubr.f32.gmra.mrb[0].mxu0 %v495
        %v661 = vpop.f32.mrb[0].mxu0
        %v662 = vadd.f32 %v476, %v661
        %v663 = vpop.f32.mrb[0].mxu0
        %v664 = vadd.f32 %v476, %v663
        %665 = vmatprep.mubr.f32.mxu0 0.0
        %666 = vmatmul.mubr.f32.gmra.mrb[0].mxu0 %v498
        %v667 = vpop.f32.mrb[0].mxu0
        %v668 = vadd.f32 %v481, %v667
        %v669 = vpop.f32.mrb[0].mxu0
        %v670 = vadd.f32 %v481, %v669
        %671 = vmatprep.mubr.f32.mxu0 0.0
        %672 = vmatmul.mubr.f32.gmra.mrb[0].mxu0 %v501
        %v673 = vpop.f32.mrb[0].mxu0
        %v674 = vadd.f32 %v486, %v673
        %v675 = vpop.f32.mrb[0].mxu0
        %v676 = vadd.f32 %v486, %v675
        %677 = vmatprep.mubr.f32.mxu0 0.0
        %678 = vmatmul.mubr.f32.gmra.mrb[0].mxu0 %v504
        %v679 = vpop.f32.mrb[0].mxu0
        %v680 = vadd.f32 %v491, %v679
        %v681 = vpop.f32.mrb[0].mxu0
        %v682 = vadd.f32 %v491, %v681
        %683 = vdwg.mxu0
        %684 = vmatprep.subr.mxu0 %v438
        %685 = vmatpush1.msra.mxu0 %v437
        %686 = vmatprep.subr.mxu0 %v446
        %687 = vmatpush1.msra.mxu0 %v445
        %688 = vmatprep.subr.mxu0 %v454
        %689 = vmatpush1.msra.mxu0 %v453
        %690 = vmatprep.subr.mxu0 %v462
        %691 = vmatpush1.msra.mxu0 %v461
        %692 = vmatprep.subr.mxu0 0.0
        %693 = vmatpush1.msra.mxu0 0.0
        %694 = vmatprep.subr.mxu0 0.0
        %695 = vmatpush1.msra.mxu0 0.0
        %696 = vmatprep.subr.mxu0 0.0
        %697 = vmatpush1.msra.mxu0 0.0
        %698 = vmatprep.subr.mxu0 0.0
        %699 = vmatpush1.msra.mxu0 0.0
        %700 = vmatprep.subr.mxu0 0.0
        %701 = vmatpush1.msra.mxu0 0.0
        %702 = vmatprep.subr.mxu0 0.0
        %703 = vmatpush1.msra.mxu0 0.0
        %704 = vmatprep.subr.mxu0 0.0
        %705 = vmatpush1.msra.mxu0 0.0
        %706 = vmatprep.subr.mxu0 0.0
        %707 = vmatpush1.msra.mxu0 0.0
        %708 = vmatprep.subr.mxu0 0.0
        %709 = vmatpush1.msra.mxu0 0.0
        %710 = vmatprep.subr.mxu0 0.0
        %711 = vmatpush1.msra.mxu0 0.0
        %712 = vmatprep.subr.mxu0 0.0
        %713 = vmatpush1.msra.mxu0 0.0
        %714 = vmatprep.subr.mxu0 0.0
        %715 = vmatpush1.msra.mxu0 0.0
        %716 = vmatprep.subr.mxu0 0.0
        %717 = vmatpush1.msra.mxu0 0.0
        %718 = vmatprep.subr.mxu0 0.0
        %719 = vmatpush1.msra.mxu0 0.0
        %720 = vmatprep.subr.mxu0 0.0
        %721 = vmatpush1.msra.mxu0 0.0
        %722 = vmatprep.subr.mxu0 0.0
        %723 = vmatpush1.msra.mxu0 0.0
        %724 = vmatprep.subr.mxu0 0.0
        %725 = vmatpush1.msra.mxu0 0.0
        %726 = vmatprep.subr.mxu0 0.0
        %727 = vmatpush1.msra.mxu0 0.0
        %728 = vmatprep.subr.mxu0 0.0
        %729 = vmatpush1.msra.mxu0 0.0
        %730 = vmatprep.subr.mxu0 0.0
        %731 = vmatpush1.msra.mxu0 0.0
        %732 = vmatprep.subr.mxu0 0.0
        %733 = vmatpush1.msra.mxu0 0.0
        %734 = vmatprep.subr.mxu0 0.0
        %735 = vmatpush1.msra.mxu0 0.0
        %736 = vmatprep.subr.mxu0 0.0
        %737 = vmatpush1.msra.mxu0 0.0
        %738 = vmatprep.subr.mxu0 0.0
        %739 = vmatpush1.msra.mxu0 0.0
        %740 = vmatprep.subr.mxu0 0.0
        %741 = vmatpush1.msra.mxu0 0.0
        %742 = vmatprep.subr.mxu0 0.0
        %743 = vmatpush1.msra.mxu0 0.0
        %744 = vmatprep.subr.mxu0 0.0
        %745 = vmatpush1.msra.mxu0 0.0
        %746 = vmatprep.subr.mxu0 0.0
        %747 = vmatpush1.msra.mxu0 0.0
        %748 = vmatprep.mubr.f32.mxu0 0.0
        %749 = vmatmul.mubr.f32.gmra.mrb[0].mxu0 %v495
        %v750 = vpop.f32.mrb[0].mxu0
        %v751 = vadd.f32 %v476, %v750
        %v752 = vpop.f32.mrb[0].mxu0
        %v753 = vadd.f32 %v476, %v752
        %754 = vmatprep.mubr.f32.mxu0 0.0
        %755 = vmatmul.mubr.f32.gmra.mrb[0].mxu0 %v498
        %v756 = vpop.f32.mrb[0].mxu0
        %v757 = vadd.f32 %v481, %v756
        %v758 = vpop.f32.mrb[0].mxu0
        %v759 = vadd.f32 %v481, %v758
        %760 = vmatprep.mubr.f32.mxu0 0.0
        %761 = vmatmul.mubr.f32.gmra.mrb[0].mxu0 %v501
        %v762 = vpop.f32.mrb[0].mxu0
        %v763 = vadd.f32 %v486, %v762
        %v764 = vpop.f32.mrb[0].mxu0
        %v765 = vadd.f32 %v486, %v764
        %766 = vmatprep.mubr.f32.mxu0 0.0
        %767 = vmatmul.mubr.f32.gmra.mrb[0].mxu0 %v504
        %v768 = vpop.f32.mrb[0].mxu0
        %v769 = vadd.f32 %v491, %v768
        %v770 = vpop.f32.mrb[0].mxu0
        %v771 = vadd.f32 %v491, %v770
        %772 = vdwg.mxu0
        %773 = vmatprep.subr.mxu0 %v440
        %774 = vmatpush1.msra.mxu0 %v439
        %775 = vmatprep.subr.mxu0 %v448
        %776 = vmatpush1.msra.mxu0 %v447
        %777 = vmatprep.subr.mxu0 %v456
        %778 = vmatpush1.msra.mxu0 %v455
        %779 = vmatprep.subr.mxu0 %v464
        %780 = vmatpush1.msra.mxu0 %v463
        %781 = vmatprep.subr.mxu0 0.0
        %782 = vmatpush1.msra.mxu0 0.0
        %783 = vmatprep.subr.mxu0 0.0
        %784 = vmatpush1.msra.mxu0 0.0
        %785 = vmatprep.subr.mxu0 0.0
        %786 = vmatpush1.msra.mxu0 0.0
        %787 = vmatprep.subr.mxu0 0.0
        %788 = vmatpush1.msra.mxu0 0.0
        %789 = vmatprep.subr.mxu0 0.0
        %790 = vmatpush1.msra.mxu0 0.0
        %791 = vmatprep.subr.mxu0 0.0
        %792 = vmatpush1.msra.mxu0 0.0
        %793 = vmatprep.subr.mxu0 0.0
        %794 = vmatpush1.msra.mxu0 0.0
        %795 = vmatprep.subr.mxu0 0.0
        %796 = vmatpush1.msra.mxu0 0.0
        %797 = vmatprep.subr.mxu0 0.0
        %798 = vmatpush1.msra.mxu0 0.0
        %799 = vmatprep.subr.mxu0 0.0
        %800 = vmatpush1.msra.mxu0 0.0
        %801 = vmatprep.subr.mxu0 0.0
        %802 = vmatpush1.msra.mxu0 0.0
        %803 = vmatprep.subr.mxu0 0.0
        %804 = vmatpush1.msra.mxu0 0.0
        %805 = vmatprep.subr.mxu0 0.0
        %806 = vmatpush1.msra.mxu0 0.0
        %807 = vmatprep.subr.mxu0 0.0
        %808 = vmatpush1.msra.mxu0 0.0
        %809 = vmatprep.subr.mxu0 0.0
        %810 = vmatpush1.msra.mxu0 0.0
        %811 = vmatprep.subr.mxu0 0.0
        %812 = vmatpush1.msra.mxu0 0.0
        %813 = vmatprep.subr.mxu0 0.0
        %814 = vmatpush1.msra.mxu0 0.0
        %815 = vmatprep.subr.mxu0 0.0
        %816 = vmatpush1.msra.mxu0 0.0
        %817 = vmatprep.subr.mxu0 0.0
        %818 = vmatpush1.msra.mxu0 0.0
        %819 = vmatprep.subr.mxu0 0.0
        %820 = vmatpush1.msra.mxu0 0.0
        %821 = vmatprep.subr.mxu0 0.0
        %822 = vmatpush1.msra.mxu0 0.0
        %823 = vmatprep.subr.mxu0 0.0
        %824 = vmatpush1.msra.mxu0 0.0
        %825 = vmatprep.subr.mxu0 0.0
        %826 = vmatpush1.msra.mxu0 0.0
        %827 = vmatprep.subr.mxu0 0.0
        %828 = vmatpush1.msra.mxu0 0.0
        %829 = vmatprep.subr.mxu0 0.0
        %830 = vmatpush1.msra.mxu0 0.0
        %831 = vmatprep.subr.mxu0 0.0
        %832 = vmatpush1.msra.mxu0 0.0
        %833 = vmatprep.subr.mxu0 0.0
        %834 = vmatpush1.msra.mxu0 0.0
        %835 = vmatprep.subr.mxu0 0.0
        %836 = vmatpush1.msra.mxu0 0.0
        %837 = vmatprep.mubr.f32.mxu0 0.0
        %838 = vmatmul.mubr.f32.gmra.mrb[0].mxu0 %v495
        %v839 = vpop.f32.mrb[0].mxu0
        %v840 = vadd.f32 %v476, %v839
        %v841 = vpop.f32.mrb[0].mxu0
        %v842 = vadd.f32 %v476, %v841
        %843 = vmatprep.mubr.f32.mxu0 0.0
        %844 = vmatmul.mubr.f32.gmra.mrb[0].mxu0 %v498
        %v845 = vpop.f32.mrb[0].mxu0
        %v846 = vadd.f32 %v481, %v845
        %v847 = vpop.f32.mrb[0].mxu0
        %v848 = vadd.f32 %v481, %v847
        %849 = vmatprep.mubr.f32.mxu0 0.0
        %850 = vmatmul.mubr.f32.gmra.mrb[0].mxu0 %v501
        %v851 = vpop.f32.mrb[0].mxu0
        %v852 = vadd.f32 %v486, %v851
        %v853 = vpop.f32.mrb[0].mxu0
        %v854 = vadd.f32 %v486, %v853
        %855 = vmatprep.mubr.f32.mxu0 0.0
        %856 = vmatmul.mubr.f32.gmra.mrb[0].mxu0 %v504
        %v857 = vpop.f32.mrb[0].mxu0
        %v858 = vadd.f32 %v491, %v857
        %v859 = vpop.f32.mrb[0].mxu0
        %v860 = vadd.f32 %v491, %v859
        %861 = vdwg.mxu0
        %v862 = vtanh.pop %v573
        %v863 = vtanh.pop %v575
        %v864 = vtanh.pop %v662
        %v865 = vtanh.pop %v664
        %v866 = vtanh.pop %v751
        %v867 = vtanh.pop %v753
        %v868 = vtanh.pop %v840
        %v869 = vtanh.pop %v842
        %v870 = vtanh.pop %v579
        %v871 = vtanh.pop %v581
        %v872 = vtanh.pop %v668
        %v873 = vtanh.pop %v670
        %v874 = vtanh.pop %v757
        %v875 = vtanh.pop %v759
        %v876 = vtanh.pop %v846
        %v877 = vtanh.pop %v848
        %v878 = vtanh.pop %v585
        %v879 = vtanh.pop %v587
        %v880 = vtanh.pop %v674
        %v881 = vtanh.pop %v676
        %v882 = vtanh.pop %v763
        %v883 = vtanh.pop %v765
        %v884 = vtanh.pop %v852
        %v885 = vtanh.pop %v854
        %v886 = vtanh.pop %v591
        %v887 = vtanh.pop %v593
        %v888 = vtanh.pop %v680
        %v889 = vtanh.pop %v682
        %v890 = vtanh.pop %v769
        %v891 = vtanh.pop %v771
        %v892 = vtanh.pop %v858
        %v893 = vtanh.pop %v860
        %v894 = vld [vmem:[%s3] sm:$0xff]
        %v895 = vld [vmem:[%s3 + $0x8] sm:$0xff]
        %v896 = vld [vmem:[%s3 + $0x10] sm:$0xff]
        %v897 = vld [vmem:[%s3 + $0x18] sm:$0xff]
        %v898 = vld [vmem:[%s4] sm:$0xff]
        %v899 = vld [vmem:[%s4 + $0x8] sm:$0xff]
        %v900 = vld [vmem:[%s4 + $0x10] sm:$0xff]
        %v901 = vld [vmem:[%s4 + $0x18] sm:$0xff]
        %903 = vset.pattern.permute.xlu0 0
        %904 = vperm.xlu0 %903, %v898
        %v905 = vpop.permute.xlu0 %904
        %908 = vset.pattern.permute.xlu0 0
        %909 = vperm.xlu0 %908, %v899
        %v910 = vpop.permute.xlu0 %909
        %913 = vset.pattern.permute.xlu0 0
        %914 = vperm.xlu0 %913, %v900
        %v915 = vpop.permute.xlu0 %914
        %918 = vset.pattern.permute.xlu0 0
        %919 = vperm.xlu0 %918, %v901
        %v920 = vpop.permute.xlu0 %919
        %v923 = vsel %vm493, %v894, 0
        %v926 = vsel %vm493, %v895, 0
        %v929 = vsel %vm493, %v896, 0
        %v932 = vsel %vm493, %v897, 0
        %934 = vmatprep.subr.mxu0 %v863
        %935 = vmatpush1.msra.mxu0 %v862
        %936 = vmatprep.subr.mxu0 %v871
        %937 = vmatpush1.msra.mxu0 %v870
        %938 = vmatprep.subr.mxu0 %v879
        %939 = vmatpush1.msra.mxu0 %v878
        %940 = vmatprep.subr.mxu0 %v887
        %941 = vmatpush1.msra.mxu0 %v886
        %942 = vmatprep.subr.mxu0 0.0
        %943 = vmatpush1.msra.mxu0 0.0
        %944 = vmatprep.subr.mxu0 0.0
        %945 = vmatpush1.msra.mxu0 0.0
        %946 = vmatprep.subr.mxu0 0.0
        %947 = vmatpush1.msra.mxu0 0.0
        %948 = vmatprep.subr.mxu0 0.0
        %949 = vmatpush1.msra.mxu0 0.0
        %950 = vmatprep.subr.mxu0 0.0
        %951 = vmatpush1.msra.mxu0 0.0
        %952 = vmatprep.subr.mxu0 0.0
        %953 = vmatpush1.msra.mxu0 0.0
        %954 = vmatprep.subr.mxu0 0.0
        %955 = vmatpush1.msra.mxu0 0.0
        %956 = vmatprep.subr.mxu0 0.0
        %957 = vmatpush1.msra.mxu0 0.0
        %958 = vmatprep.subr.mxu0 0.0
        %959 = vmatpush1.msra.mxu0 0.0
        %960 = vmatprep.subr.mxu0 0.0
        %961 = vmatpush1.msra.mxu0 0.0
        %962 = vmatprep.subr.mxu0 0.0
        %963 = vmatpush1.msra.mxu0 0.0
        %964 = vmatprep.subr.mxu0 0.0
        %965 = vmatpush1.msra.mxu0 0.0
        %966 = vmatprep.subr.mxu0 0.0
        %967 = vmatpush1.msra.mxu0 0.0
        %968 = vmatprep.subr.mxu0 0.0
        %969 = vmatpush1.msra.mxu0 0.0
        %970 = vmatprep.subr.mxu0 0.0
        %971 = vmatpush1.msra.mxu0 0.0
        %972 = vmatprep.subr.mxu0 0.0
        %973 = vmatpush1.msra.mxu0 0.0
        %974 = vmatprep.subr.mxu0 0.0
        %975 = vmatpush1.msra.mxu0 0.0
        %976 = vmatprep.subr.mxu0 0.0
        %977 = vmatpush1.msra.mxu0 0.0
        %978 = vmatprep.subr.mxu0 0.0
        %979 = vmatpush1.msra.mxu0 0.0
        %980 = vmatprep.subr.mxu0 0.0
        %981 = vmatpush1.msra.mxu0 0.0
        %982 = vmatprep.subr.mxu0 0.0
        %983 = vmatpush1.msra.mxu0 0.0
        %984 = vmatprep.subr.mxu0 0.0
        %985 = vmatpush1.msra.mxu0 0.0
        %986 = vmatprep.subr.mxu0 0.0
        %987 = vmatpush1.msra.mxu0 0.0
        %988 = vmatprep.subr.mxu0 0.0
        %989 = vmatpush1.msra.mxu0 0.0
        %990 = vmatprep.subr.mxu0 0.0
        %991 = vmatpush1.msra.mxu0 0.0
        %992 = vmatprep.subr.mxu0 0.0
        %993 = vmatpush1.msra.mxu0 0.0
        %994 = vmatprep.subr.mxu0 0.0
        %995 = vmatpush1.msra.mxu0 0.0
        %996 = vmatprep.subr.mxu0 0.0
        %997 = vmatpush1.msra.mxu0 0.0
        %998 = vmatprep.mubr.f32.mxu0 0.0
        %999 = vmatmul.mubr.f32.gmra.mrb[0].mxu0 %v923
        %v1000 = vpop.f32.mrb[0].mxu0
        %v1001 = vadd.f32 %v905, %v1000
        %v1002 = vpop.f32.mrb[0].mxu0
        %v1003 = vadd.f32 %v905, %v1002
        %1004 = vmatprep.mubr.f32.mxu0 0.0
        %1005 = vmatmul.mubr.f32.gmra.mrb[0].mxu0 %v926
        %v1006 = vpop.f32.mrb[0].mxu0
        %v1007 = vadd.f32 %v910, %v1006
        %v1008 = vpop.f32.mrb[0].mxu0
        %v1009 = vadd.f32 %v910, %v1008
        %1010 = vmatprep.mubr.f32.mxu0 0.0
        %1011 = vmatmul.mubr.f32.gmra.mrb[0].mxu0 %v929
        %v1012 = vpop.f32.mrb[0].mxu0
        %v1013 = vadd.f32 %v915, %v1012
        %v1014 = vpop.f32.mrb[0].mxu0
        %v1015 = vadd.f32 %v915, %v1014
        %1016 = vmatprep.mubr.f32.mxu0 0.0
        %1017 = vmatmul.mubr.f32.gmra.mrb[0].mxu0 %v932
        %v1018 = vpop.f32.mrb[0].mxu0
        %v1019 = vadd.f32 %v920, %v1018
        %v1020 = vpop.f32.mrb[0].mxu0
        %v1021 = vadd.f32 %v920, %v1020
        %1022 = vdwg.mxu0
        %1023 = vmatprep.subr.mxu0 %v865
        %1024 = vmatpush1.msra.mxu0 %v864
        %1025 = vmatprep.subr.mxu0 %v873
        %1026 = vmatpush1.msra.mxu0 %v872
        %1027 = vmatprep.subr.mxu0 %v881
        %1028 = vmatpush1.msra.mxu0 %v880
        %1029 = vmatprep.subr.mxu0 %v889
        %1030 = vmatpush1.msra.mxu0 %v888
        %1031 = vmatprep.subr.mxu0 0.0
        %1032 = vmatpush1.msra.mxu0 0.0
        %1033 = vmatprep.subr.mxu0 0.0
        %1034 = vmatpush1.msra.mxu0 0.0
        %1035 = vmatprep.subr.mxu0 0.0
        %1036 = vmatpush1.msra.mxu0 0.0
        %1037 = vmatprep.subr.mxu0 0.0
        %1038 = vmatpush1.msra.mxu0 0.0
        %1039 = vmatprep.subr.mxu0 0.0
        %1040 = vmatpush1.msra.mxu0 0.0
        %1041 = vmatprep.subr.mxu0 0.0
        %1042 = vmatpush1.msra.mxu0 0.0
        %1043 = vmatprep.subr.mxu0 0.0
        %1044 = vmatpush1.msra.mxu0 0.0
        %1045 = vmatprep.subr.mxu0 0.0
        %1046 = vmatpush1.msra.mxu0 0.0
        %1047 = vmatprep.subr.mxu0 0.0
        %1048 = vmatpush1.msra.mxu0 0.0
        %1049 = vmatprep.subr.mxu0 0.0
        %1050 = vmatpush1.msra.mxu0 0.0
        %1051 = vmatprep.subr.mxu0 0.0
        %1052 = vmatpush1.msra.mxu0 0.0
        %1053 = vmatprep.subr.mxu0 0.0
        %1054 = vmatpush1.msra.mxu0 0.0
        %1055 = vmatprep.subr.mxu0 0.0
        %1056 = vmatpush1.msra.mxu0 0.0
        %1057 = vmatprep.subr.mxu0 0.0
        %1058 = vmatpush1.msra.mxu0 0.0
        %1059 = vmatprep.subr.mxu0 0.0
        %1060 = vmatpush1.msra.mxu0 0.0
        %1061 = vmatprep.subr.mxu0 0.0
        %1062 = vmatpush1.msra.mxu0 0.0
        %1063 = vmatprep.subr.mxu0 0.0
        %1064 = vmatpush1.msra.mxu0 0.0
        %1065 = vmatprep.subr.mxu0 0.0
        %1066 = vmatpush1.msra.mxu0 0.0
        %1067 = vmatprep.subr.mxu0 0.0
        %1068 = vmatpush1.msra.mxu0 0.0
        %1069 = vmatprep.subr.mxu0 0.0
        %1070 = vmatpush1.msra.mxu0 0.0
        %1071 = vmatprep.subr.mxu0 0.0
        %1072 = vmatpush1.msra.mxu0 0.0
        %1073 = vmatprep.subr.mxu0 0.0
        %1074 = vmatpush1.msra.mxu0 0.0
        %1075 = vmatprep.subr.mxu0 0.0
        %1076 = vmatpush1.msra.mxu0 0.0
        %1077 = vmatprep.subr.mxu0 0.0
        %1078 = vmatpush1.msra.mxu0 0.0
        %1079 = vmatprep.subr.mxu0 0.0
        %1080 = vmatpush1.msra.mxu0 0.0
        %1081 = vmatprep.subr.mxu0 0.0
        %1082 = vmatpush1.msra.mxu0 0.0
        %1083 = vmatprep.subr.mxu0 0.0
        %1084 = vmatpush1.msra.mxu0 0.0
        %1085 = vmatprep.subr.mxu0 0.0
        %1086 = vmatpush1.msra.mxu0 0.0
        %1087 = vmatprep.mubr.f32.mxu0 0.0
        %1088 = vmatmul.mubr.f32.gmra.mrb[0].mxu0 %v923
        %v1089 = vpop.f32.mrb[0].mxu0
        %v1090 = vadd.f32 %v905, %v1089
        %v1091 = vpop.f32.mrb[0].mxu0
        %v1092 = vadd.f32 %v905, %v1091
        %1093 = vmatprep.mubr.f32.mxu0 0.0
        %1094 = vmatmul.mubr.f32.gmra.mrb[0].mxu0 %v926
        %v1095 = vpop.f32.mrb[0].mxu0
        %v1096 = vadd.f32 %v910, %v1095
        %v1097 = vpop.f32.mrb[0].mxu0
        %v1098 = vadd.f32 %v910, %v1097
        %1099 = vmatprep.mubr.f32.mxu0 0.0
        %1100 = vmatmul.mubr.f32.gmra.mrb[0].mxu0 %v929
        %v1101 = vpop.f32.mrb[0].mxu0
        %v1102 = vadd.f32 %v915, %v1101
        %v1103 = vpop.f32.mrb[0].mxu0
        %v1104 = vadd.f32 %v915, %v1103
        %1105 = vmatprep.mubr.f32.mxu0 0.0
        %1106 = vmatmul.mubr.f32.gmra.mrb[0].mxu0 %v932
        %v1107 = vpop.f32.mrb[0].mxu0
        %v1108 = vadd.f32 %v920, %v1107
        %v1109 = vpop.f32.mrb[0].mxu0
        %v1110 = vadd.f32 %v920, %v1109
        %1111 = vdwg.mxu0
        %1112 = vmatprep.subr.mxu0 %v867
        %1113 = vmatpush1.msra.mxu0 %v866
        %1114 = vmatprep.subr.mxu0 %v875
        %1115 = vmatpush1.msra.mxu0 %v874
        %1116 = vmatprep.subr.mxu0 %v883
        %1117 = vmatpush1.msra.mxu0 %v882
        %1118 = vmatprep.subr.mxu0 %v891
        %1119 = vmatpush1.msra.mxu0 %v890
        %1120 = vmatprep.subr.mxu0 0.0
        %1121 = vmatpush1.msra.mxu0 0.0
        %1122 = vmatprep.subr.mxu0 0.0
        %1123 = vmatpush1.msra.mxu0 0.0
        %1124 = vmatprep.subr.mxu0 0.0
        %1125 = vmatpush1.msra.mxu0 0.0
        %1126 = vmatprep.subr.mxu0 0.0
        %1127 = vmatpush1.msra.mxu0 0.0
        %1128 = vmatprep.subr.mxu0 0.0
        %1129 = vmatpush1.msra.mxu0 0.0
        %1130 = vmatprep.subr.mxu0 0.0
        %1131 = vmatpush1.msra.mxu0 0.0
        %1132 = vmatprep.subr.mxu0 0.0
        %1133 = vmatpush1.msra.mxu0 0.0
        %1134 = vmatprep.subr.mxu0 0.0
        %1135 = vmatpush1.msra.mxu0 0.0
        %1136 = vmatprep.subr.mxu0 0.0
        %1137 = vmatpush1.msra.mxu0 0.0
        %1138 = vmatprep.subr.mxu0 0.0
        %1139 = vmatpush1.msra.mxu0 0.0
        %1140 = vmatprep.subr.mxu0 0.0
        %1141 = vmatpush1.msra.mxu0 0.0
        %1142 = vmatprep.subr.mxu0 0.0
        %1143 = vmatpush1.msra.mxu0 0.0
        %1144 = vmatprep.subr.mxu0 0.0
        %1145 = vmatpush1.msra.mxu0 0.0
        %1146 = vmatprep.subr.mxu0 0.0
        %1147 = vmatpush1.msra.mxu0 0.0
        %1148 = vmatprep.subr.mxu0 0.0
        %1149 = vmatpush1.msra.mxu0 0.0
        %1150 = vmatprep.subr.mxu0 0.0
        %1151 = vmatpush1.msra.mxu0 0.0
        %1152 = vmatprep.subr.mxu0 0.0
        %1153 = vmatpush1.msra.mxu0 0.0
        %1154 = vmatprep.subr.mxu0 0.0
        %1155 = vmatpush1.msra.mxu0 0.0
        %1156 = vmatprep.subr.mxu0 0.0
        %1157 = vmatpush1.msra.mxu0 0.0
        %1158 = vmatprep.subr.mxu0 0.0
        %1159 = vmatpush1.msra.mxu0 0.0
        %1160 = vmatprep.subr.mxu0 0.0
        %1161 = vmatpush1.msra.mxu0 0.0
        %1162 = vmatprep.subr.mxu0 0.0
        %1163 = vmatpush1.msra.mxu0 0.0
        %1164 = vmatprep.subr.mxu0 0.0
        %1165 = vmatpush1.msra.mxu0 0.0
        %1166 = vmatprep.subr.mxu0 0.0
        %1167 = vmatpush1.msra.mxu0 0.0
        %1168 = vmatprep.subr.mxu0 0.0
        %1169 = vmatpush1.msra.mxu0 0.0
        %1170 = vmatprep.subr.mxu0 0.0
        %1171 = vmatpush1.msra.mxu0 0.0
        %1172 = vmatprep.subr.mxu0 0.0
        %1173 = vmatpush1.msra.mxu0 0.0
        %1174 = vmatprep.subr.mxu0 0.0
        %1175 = vmatpush1.msra.mxu0 0.0
        %1176 = vmatprep.mubr.f32.mxu0 0.0
        %1177 = vmatmul.mubr.f32.gmra.mrb[0].mxu0 %v923
        %v1178 = vpop.f32.mrb[0].mxu0
        %v1179 = vadd.f32 %v905, %v1178
        %v1180 = vpop.f32.mrb[0].mxu0
        %v1181 = vadd.f32 %v905, %v1180
        %1182 = vmatprep.mubr.f32.mxu0 0.0
        %1183 = vmatmul.mubr.f32.gmra.mrb[0].mxu0 %v926
        %v1184 = vpop.f32.mrb[0].mxu0
        %v1185 = vadd.f32 %v910, %v1184
        %v1186 = vpop.f32.mrb[0].mxu0
        %v1187 = vadd.f32 %v910, %v1186
        %1188 = vmatprep.mubr.f32.mxu0 0.0
        %1189 = vmatmul.mubr.f32.gmra.mrb[0].mxu0 %v929
        %v1190 = vpop.f32.mrb[0].mxu0
        %v1191 = vadd.f32 %v915, %v1190
        %v1192 = vpop.f32.mrb[0].mxu0
        %v1193 = vadd.f32 %v915, %v1192
        %1194 = vmatprep.mubr.f32.mxu0 0.0
        %1195 = vmatmul.mubr.f32.gmra.mrb[0].mxu0 %v932
        %v1196 = vpop.f32.mrb[0].mxu0
        %v1197 = vadd.f32 %v920, %v1196
        %v1198 = vpop.f32.mrb[0].mxu0
        %v1199 = vadd.f32 %v920, %v1198
        %1200 = vdwg.mxu0
        %1201 = vmatprep.subr.mxu0 %v869
        %1202 = vmatpush1.msra.mxu0 %v868
        %1203 = vmatprep.subr.mxu0 %v877
        %1204 = vmatpush1.msra.mxu0 %v876
        %1205 = vmatprep.subr.mxu0 %v885
        %1206 = vmatpush1.msra.mxu0 %v884
        %1207 = vmatprep.subr.mxu0 %v893
        %1208 = vmatpush1.msra.mxu0 %v892
        %1209 = vmatprep.subr.mxu0 0.0
        %1210 = vmatpush1.msra.mxu0 0.0
        %1211 = vmatprep.subr.mxu0 0.0
        %1212 = vmatpush1.msra.mxu0 0.0
        %1213 = vmatprep.subr.mxu0 0.0
        %1214 = vmatpush1.msra.mxu0 0.0
        %1215 = vmatprep.subr.mxu0 0.0
        %1216 = vmatpush1.msra.mxu0 0.0
        %1217 = vmatprep.subr.mxu0 0.0
        %1218 = vmatpush1.msra.mxu0 0.0
        %1219 = vmatprep.subr.mxu0 0.0
        %1220 = vmatpush1.msra.mxu0 0.0
        %1221 = vmatprep.subr.mxu0 0.0
        %1222 = vmatpush1.msra.mxu0 0.0
        %1223 = vmatprep.subr.mxu0 0.0
        %1224 = vmatpush1.msra.mxu0 0.0
        %1225 = vmatprep.subr.mxu0 0.0
        %1226 = vmatpush1.msra.mxu0 0.0
        %1227 = vmatprep.subr.mxu0 0.0
        %1228 = vmatpush1.msra.mxu0 0.0
        %1229 = vmatprep.subr.mxu0 0.0
        %1230 = vmatpush1.msra.mxu0 0.0
        %1231 = vmatprep.subr.mxu0 0.0
        %1232 = vmatpush1.msra.mxu0 0.0
        %1233 = vmatprep.subr.mxu0 0.0
        %1234 = vmatpush1.msra.mxu0 0.0
        %1235 = vmatprep.subr.mxu0 0.0
        %1236 = vmatpush1.msra.mxu0 0.0
        %1237 = vmatprep.subr.mxu0 0.0
        %1238 = vmatpush1.msra.mxu0 0.0
        %1239 = vmatprep.subr.mxu0 0.0
        %1240 = vmatpush1.msra.mxu0 0.0
        %1241 = vmatprep.subr.mxu0 0.0
        %1242 = vmatpush1.msra.mxu0 0.0
        %1243 = vmatprep.subr.mxu0 0.0
        %1244 = vmatpush1.msra.mxu0 0.0
        %1245 = vmatprep.subr.mxu0 0.0
        %1246 = vmatpush1.msra.mxu0 0.0
        %1247 = vmatprep.subr.mxu0 0.0
        %1248 = vmatpush1.msra.mxu0 0.0
        %1249 = vmatprep.subr.mxu0 0.0
        %1250 = vmatpush1.msra.mxu0 0.0
        %1251 = vmatprep.subr.mxu0 0.0
        %1252 = vmatpush1.msra.mxu0 0.0
        %1253 = vmatprep.subr.mxu0 0.0
        %1254 = vmatpush1.msra.mxu0 0.0
        %1255 = vmatprep.subr.mxu0 0.0
        %1256 = vmatpush1.msra.mxu0 0.0
        %1257 = vmatprep.subr.mxu0 0.0
        %1258 = vmatpush1.msra.mxu0 0.0
        %1259 = vmatprep.subr.mxu0 0.0
        %1260 = vmatpush1.msra.mxu0 0.0
        %1261 = vmatprep.subr.mxu0 0.0
        %1262 = vmatpush1.msra.mxu0 0.0
        %1263 = vmatprep.subr.mxu0 0.0
        %1264 = vmatpush1.msra.mxu0 0.0
        %1265 = vmatprep.mubr.f32.mxu0 0.0
        %1266 = vmatmul.mubr.f32.gmra.mrb[0].mxu0 %v923
        %v1267 = vpop.f32.mrb[0].mxu0
        %v1268 = vadd.f32 %v905, %v1267
        %v1269 = vpop.f32.mrb[0].mxu0
        %v1270 = vadd.f32 %v905, %v1269
        %1271 = vmatprep.mubr.f32.mxu0 0.0
        %1272 = vmatmul.mubr.f32.gmra.mrb[0].mxu0 %v926
        %v1273 = vpop.f32.mrb[0].mxu0
        %v1274 = vadd.f32 %v910, %v1273
        %v1275 = vpop.f32.mrb[0].mxu0
        %v1276 = vadd.f32 %v910, %v1275
        %1277 = vmatprep.mubr.f32.mxu0 0.0
        %1278 = vmatmul.mubr.f32.gmra.mrb[0].mxu0 %v929
        %v1279 = vpop.f32.mrb[0].mxu0
        %v1280 = vadd.f32 %v915, %v1279
        %v1281 = vpop.f32.mrb[0].mxu0
        %v1282 = vadd.f32 %v915, %v1281
        %1283 = vmatprep.mubr.f32.mxu0 0.0
        %1284 = vmatmul.mubr.f32.gmra.mrb[0].mxu0 %v932
        %v1285 = vpop.f32.mrb[0].mxu0
        %v1286 = vadd.f32 %v920, %v1285
        %v1287 = vpop.f32.mrb[0].mxu0
        %v1288 = vadd.f32 %v920, %v1287
        %1289 = vdwg.mxu0
        %v1290 = vtanh.pop %v1001
        %v1291 = vtanh.pop %v1003
        %v1292 = vtanh.pop %v1090
        %v1293 = vtanh.pop %v1092
        %v1294 = vtanh.pop %v1179
        %v1295 = vtanh.pop %v1181
        %v1296 = vtanh.pop %v1268
        %v1297 = vtanh.pop %v1270
        %v1298 = vtanh.pop %v1007
        %v1299 = vtanh.pop %v1009
        %v1300 = vtanh.pop %v1096
        %v1301 = vtanh.pop %v1098
        %v1302 = vtanh.pop %v1185
        %v1303 = vtanh.pop %v1187
        %v1304 = vtanh.pop %v1274
        %v1305 = vtanh.pop %v1276
        %v1306 = vtanh.pop %v1013
        %v1307 = vtanh.pop %v1015
        %v1308 = vtanh.pop %v1102
        %v1309 = vtanh.pop %v1104
        %v1310 = vtanh.pop %v1191
        %v1311 = vtanh.pop %v1193
        %v1312 = vtanh.pop %v1280
        %v1313 = vtanh.pop %v1282
        %v1314 = vtanh.pop %v1019
        %v1315 = vtanh.pop %v1021
        %v1316 = vtanh.pop %v1108
        %v1317 = vtanh.pop %v1110
        %v1318 = vtanh.pop %v1197
        %v1319 = vtanh.pop %v1199
        %v1320 = vtanh.pop %v1286
        %v1321 = vtanh.pop %v1288
        %s1322 = scalar_lea.vmem %s3, 32
        %v1323 = vld [vmem:[%s1322] sm:$0xff]
        %v1324 = vld [vmem:[%s1322 + $0x8] sm:$0xff]
        %v1325 = vld [vmem:[%s1322 + $0x10] sm:$0xff]
        %v1326 = vld [vmem:[%s1322 + $0x18] sm:$0xff]
        %s1327 = scalar_lea.vmem %s4, 32
        %v1328 = vld [vmem:[%s1327] sm:$0xff]
        %v1329 = vld [vmem:[%s1327 + $0x8] sm:$0xff]
        %v1330 = vld [vmem:[%s1327 + $0x10] sm:$0xff]
        %v1331 = vld [vmem:[%s1327 + $0x18] sm:$0xff]
        %1333 = vset.pattern.permute.xlu0 0
        %1334 = vperm.xlu0 %1333, %v1328
        %v1335 = vpop.permute.xlu0 %1334
        %1338 = vset.pattern.permute.xlu0 0
        %1339 = vperm.xlu0 %1338, %v1329
        %v1340 = vpop.permute.xlu0 %1339
        %1343 = vset.pattern.permute.xlu0 0
        %1344 = vperm.xlu0 %1343, %v1330
        %v1345 = vpop.permute.xlu0 %1344
        %1348 = vset.pattern.permute.xlu0 0
        %1349 = vperm.xlu0 %1348, %v1331
        %v1350 = vpop.permute.xlu0 %1349
        %v1353 = vsel %vm493, %v1323, 0
        %v1356 = vsel %vm493, %v1324, 0
        %v1359 = vsel %vm493, %v1325, 0
        %v1362 = vsel %vm493, %v1326, 0
        %1364 = vmatprep.subr.mxu0 %v1291
        %1365 = vmatpush1.msra.mxu0 %v1290
        %1366 = vmatprep.subr.mxu0 %v1299
        %1367 = vmatpush1.msra.mxu0 %v1298
        %1368 = vmatprep.subr.mxu0 %v1307
        %1369 = vmatpush1.msra.mxu0 %v1306
        %1370 = vmatprep.subr.mxu0 %v1315
        %1371 = vmatpush1.msra.mxu0 %v1314
        %1372 = vmatprep.subr.mxu0 0.0
        %1373 = vmatpush1.msra.mxu0 0.0
        %1374 = vmatprep.subr.mxu0 0.0
        %1375 = vmatpush1.msra.mxu0 0.0
        %1376 = vmatprep.subr.mxu0 0.0
        %1377 = vmatpush1.msra.mxu0 0.0
        %1378 = vmatprep.subr.mxu0 0.0
        %1379 = vmatpush1.msra.mxu0 0.0
        %1380 = vmatprep.subr.mxu0 0.0
        %1381 = vmatpush1.msra.mxu0 0.0
        %1382 = vmatprep.subr.mxu0 0.0
        %1383 = vmatpush1.msra.mxu0 0.0
        %1384 = vmatprep.subr.mxu0 0.0
        %1385 = vmatpush1.msra.mxu0 0.0
        %1386 = vmatprep.subr.mxu0 0.0
        %1387 = vmatpush1.msra.mxu0 0.0
        %1388 = vmatprep.subr.mxu0 0.0
        %1389 = vmatpush1.msra.mxu0 0.0
        %1390 = vmatprep.subr.mxu0 0.0
        %1391 = vmatpush1.msra.mxu0 0.0
        %1392 = vmatprep.subr.mxu0 0.0
        %1393 = vmatpush1.msra.mxu0 0.0
        %1394 = vmatprep.subr.mxu0 0.0
        %1395 = vmatpush1.msra.mxu0 0.0
        %1396 = vmatprep.subr.mxu0 0.0
        %1397 = vmatpush1.msra.mxu0 0.0
        %1398 = vmatprep.subr.mxu0 0.0
        %1399 = vmatpush1.msra.mxu0 0.0
        %1400 = vmatprep.subr.mxu0 0.0
        %1401 = vmatpush1.msra.mxu0 0.0
        %1402 = vmatprep.subr.mxu0 0.0
        %1403 = vmatpush1.msra.mxu0 0.0
        %1404 = vmatprep.subr.mxu0 0.0
        %1405 = vmatpush1.msra.mxu0 0.0
        %1406 = vmatprep.subr.mxu0 0.0
        %1407 = vmatpush1.msra.mxu0 0.0
        %1408 = vmatprep.subr.mxu0 0.0
        %1409 = vmatpush1.msra.mxu0 0.0
        %1410 = vmatprep.subr.mxu0 0.0
        %1411 = vmatpush1.msra.mxu0 0.0
        %1412 = vmatprep.subr.mxu0 0.0
        %1413 = vmatpush1.msra.mxu0 0.0
        %1414 = vmatprep.subr.mxu0 0.0
        %1415 = vmatpush1.msra.mxu0 0.0
        %1416 = vmatprep.subr.mxu0 0.0
        %1417 = vmatpush1.msra.mxu0 0.0
        %1418 = vmatprep.subr.mxu0 0.0
        %1419 = vmatpush1.msra.mxu0 0.0
        %1420 = vmatprep.subr.mxu0 0.0
        %1421 = vmatpush1.msra.mxu0 0.0
        %1422 = vmatprep.subr.mxu0 0.0
        %1423 = vmatpush1.msra.mxu0 0.0
        %1424 = vmatprep.subr.mxu0 0.0
        %1425 = vmatpush1.msra.mxu0 0.0
        %1426 = vmatprep.subr.mxu0 0.0
        %1427 = vmatpush1.msra.mxu0 0.0
        %1428 = vmatprep.mubr.f32.mxu0 0.0
        %1429 = vmatmul.mubr.f32.gmra.mrb[0].mxu0 %v1353
        %v1430 = vpop.f32.mrb[0].mxu0
        %v1431 = vadd.f32 %v1335, %v1430
        %v1432 = vpop.f32.mrb[0].mxu0
        %v1433 = vadd.f32 %v1335, %v1432
        %1434 = vmatprep.mubr.f32.mxu0 0.0
        %1435 = vmatmul.mubr.f32.gmra.mrb[0].mxu0 %v1356
        %v1436 = vpop.f32.mrb[0].mxu0
        %v1437 = vadd.f32 %v1340, %v1436
        %v1438 = vpop.f32.mrb[0].mxu0
        %v1439 = vadd.f32 %v1340, %v1438
        %1440 = vmatprep.mubr.f32.mxu0 0.0
        %1441 = vmatmul.mubr.f32.gmra.mrb[0].mxu0 %v1359
        %v1442 = vpop.f32.mrb[0].mxu0
        %v1443 = vadd.f32 %v1345, %v1442
        %v1444 = vpop.f32.mrb[0].mxu0
        %v1445 = vadd.f32 %v1345, %v1444
        %1446 = vmatprep.mubr.f32.mxu0 0.0
        %1447 = vmatmul.mubr.f32.gmra.mrb[0].mxu0 %v1362
        %v1448 = vpop.f32.mrb[0].mxu0
        %v1449 = vadd.f32 %v1350, %v1448
        %v1450 = vpop.f32.mrb[0].mxu0
        %v1451 = vadd.f32 %v1350, %v1450
        %1452 = vdwg.mxu0
        %1453 = vmatprep.subr.mxu0 %v1293
        %1454 = vmatpush1.msra.mxu0 %v1292
        %1455 = vmatprep.subr.mxu0 %v1301
        %1456 = vmatpush1.msra.mxu0 %v1300
        %1457 = vmatprep.subr.mxu0 %v1309
        %1458 = vmatpush1.msra.mxu0 %v1308
        %1459 = vmatprep.subr.mxu0 %v1317
        %1460 = vmatpush1.msra.mxu0 %v1316
        %1461 = vmatprep.subr.mxu0 0.0
        %1462 = vmatpush1.msra.mxu0 0.0
        %1463 = vmatprep.subr.mxu0 0.0
        %1464 = vmatpush1.msra.mxu0 0.0
        %1465 = vmatprep.subr.mxu0 0.0
        %1466 = vmatpush1.msra.mxu0 0.0
        %1467 = vmatprep.subr.mxu0 0.0
        %1468 = vmatpush1.msra.mxu0 0.0
        %1469 = vmatprep.subr.mxu0 0.0
        %1470 = vmatpush1.msra.mxu0 0.0
        %1471 = vmatprep.subr.mxu0 0.0
        %1472 = vmatpush1.msra.mxu0 0.0
        %1473 = vmatprep.subr.mxu0 0.0
        %1474 = vmatpush1.msra.mxu0 0.0
        %1475 = vmatprep.subr.mxu0 0.0
        %1476 = vmatpush1.msra.mxu0 0.0
        %1477 = vmatprep.subr.mxu0 0.0
        %1478 = vmatpush1.msra.mxu0 0.0
        %1479 = vmatprep.subr.mxu0 0.0
        %1480 = vmatpush1.msra.mxu0 0.0
        %1481 = vmatprep.subr.mxu0 0.0
        %1482 = vmatpush1.msra.mxu0 0.0
        %1483 = vmatprep.subr.mxu0 0.0
        %1484 = vmatpush1.msra.mxu0 0.0
        %1485 = vmatprep.subr.mxu0 0.0
        %1486 = vmatpush1.msra.mxu0 0.0
        %1487 = vmatprep.subr.mxu0 0.0
        %1488 = vmatpush1.msra.mxu0 0.0
        %1489 = vmatprep.subr.mxu0 0.0
        %1490 = vmatpush1.msra.mxu0 0.0
        %1491 = vmatprep.subr.mxu0 0.0
        %1492 = vmatpush1.msra.mxu0 0.0
        %1493 = vmatprep.subr.mxu0 0.0
        %1494 = vmatpush1.msra.mxu0 0.0
        %1495 = vmatprep.subr.mxu0 0.0
        %1496 = vmatpush1.msra.mxu0 0.0
        %1497 = vmatprep.subr.mxu0 0.0
        %1498 = vmatpush1.msra.mxu0 0.0
        %1499 = vmatprep.subr.mxu0 0.0
        %1500 = vmatpush1.msra.mxu0 0.0
        %1501 = vmatprep.subr.mxu0 0.0
        %1502 = vmatpush1.msra.mxu0 0.0
        %1503 = vmatprep.subr.mxu0 0.0
        %1504 = vmatpush1.msra.mxu0 0.0
        %1505 = vmatprep.subr.mxu0 0.0
        %1506 = vmatpush1.msra.mxu0 0.0
        %1507 = vmatprep.subr.mxu0 0.0
        %1508 = vmatpush1.msra.mxu0 0.0
        %1509 = vmatprep.subr.mxu0 0.0
        %1510 = vmatpush1.msra.mxu0 0.0
        %1511 = vmatprep.subr.mxu0 0.0
        %1512 = vmatpush1.msra.mxu0 0.0
        %1513 = vmatprep.subr.mxu0 0.0
        %1514 = vmatpush1.msra.mxu0 0.0
        %1515 = vmatprep.subr.mxu0 0.0
        %1516 = vmatpush1.msra.mxu0 0.0
        %1517 = vmatprep.mubr.f32.mxu0 0.0
        %1518 = vmatmul.mubr.f32.gmra.mrb[0].mxu0 %v1353
        %v1519 = vpop.f32.mrb[0].mxu0
        %v1520 = vadd.f32 %v1335, %v1519
        %v1521 = vpop.f32.mrb[0].mxu0
        %v1522 = vadd.f32 %v1335, %v1521
        %1523 = vmatprep.mubr.f32.mxu0 0.0
        %1524 = vmatmul.mubr.f32.gmra.mrb[0].mxu0 %v1356
        %v1525 = vpop.f32.mrb[0].mxu0
        %v1526 = vadd.f32 %v1340, %v1525
        %v1527 = vpop.f32.mrb[0].mxu0
        %v1528 = vadd.f32 %v1340, %v1527
        %1529 = vmatprep.mubr.f32.mxu0 0.0
        %1530 = vmatmul.mubr.f32.gmra.mrb[0].mxu0 %v1359
        %v1531 = vpop.f32.mrb[0].mxu0
        %v1532 = vadd.f32 %v1345, %v1531
        %v1533 = vpop.f32.mrb[0].mxu0
        %v1534 = vadd.f32 %v1345, %v1533
        %1535 = vmatprep.mubr.f32.mxu0 0.0
        %1536 = vmatmul.mubr.f32.gmra.mrb[0].mxu0 %v1362
        %v1537 = vpop.f32.mrb[0].mxu0
        %v1538 = vadd.f32 %v1350, %v1537
        %v1539 = vpop.f32.mrb[0].mxu0
        %v1540 = vadd.f32 %v1350, %v1539
        %1541 = vdwg.mxu0
        %1542 = vmatprep.subr.mxu0 %v1295
        %1543 = vmatpush1.msra.mxu0 %v1294
        %1544 = vmatprep.subr.mxu0 %v1303
        %1545 = vmatpush1.msra.mxu0 %v1302
        %1546 = vmatprep.subr.mxu0 %v1311
        %1547 = vmatpush1.msra.mxu0 %v1310
        %1548 = vmatprep.subr.mxu0 %v1319
        %1549 = vmatpush1.msra.mxu0 %v1318
        %1550 = vmatprep.subr.mxu0 0.0
        %1551 = vmatpush1.msra.mxu0 0.0
        %1552 = vmatprep.subr.mxu0 0.0
        %1553 = vmatpush1.msra.mxu0 0.0
        %1554 = vmatprep.subr.mxu0 0.0
        %1555 = vmatpush1.msra.mxu0 0.0
        %1556 = vmatprep.subr.mxu0 0.0
        %1557 = vmatpush1.msra.mxu0 0.0
        %1558 = vmatprep.subr.mxu0 0.0
        %1559 = vmatpush1.msra.mxu0 0.0
        %1560 = vmatprep.subr.mxu0 0.0
        %1561 = vmatpush1.msra.mxu0 0.0
        %1562 = vmatprep.subr.mxu0 0.0
        %1563 = vmatpush1.msra.mxu0 0.0
        %1564 = vmatprep.subr.mxu0 0.0
        %1565 = vmatpush1.msra.mxu0 0.0
        %1566 = vmatprep.subr.mxu0 0.0
        %1567 = vmatpush1.msra.mxu0 0.0
        %1568 = vmatprep.subr.mxu0 0.0
        %1569 = vmatpush1.msra.mxu0 0.0
        %1570 = vmatprep.subr.mxu0 0.0
        %1571 = vmatpush1.msra.mxu0 0.0
        %1572 = vmatprep.subr.mxu0 0.0
        %1573 = vmatpush1.msra.mxu0 0.0
        %1574 = vmatprep.subr.mxu0 0.0
        %1575 = vmatpush1.msra.mxu0 0.0
        %1576 = vmatprep.subr.mxu0 0.0
        %1577 = vmatpush1.msra.mxu0 0.0
        %1578 = vmatprep.subr.mxu0 0.0
        %1579 = vmatpush1.msra.mxu0 0.0
        %1580 = vmatprep.subr.mxu0 0.0
        %1581 = vmatpush1.msra.mxu0 0.0
        %1582 = vmatprep.subr.mxu0 0.0
        %1583 = vmatpush1.msra.mxu0 0.0
        %1584 = vmatprep.subr.mxu0 0.0
        %1585 = vmatpush1.msra.mxu0 0.0
        %1586 = vmatprep.subr.mxu0 0.0
        %1587 = vmatpush1.msra.mxu0 0.0
        %1588 = vmatprep.subr.mxu0 0.0
        %1589 = vmatpush1.msra.mxu0 0.0
        %1590 = vmatprep.subr.mxu0 0.0
        %1591 = vmatpush1.msra.mxu0 0.0
        %1592 = vmatprep.subr.mxu0 0.0
        %1593 = vmatpush1.msra.mxu0 0.0
        %1594 = vmatprep.subr.mxu0 0.0
        %1595 = vmatpush1.msra.mxu0 0.0
        %1596 = vmatprep.subr.mxu0 0.0
        %1597 = vmatpush1.msra.mxu0 0.0
        %1598 = vmatprep.subr.mxu0 0.0
        %1599 = vmatpush1.msra.mxu0 0.0
        %1600 = vmatprep.subr.mxu0 0.0
        %1601 = vmatpush1.msra.mxu0 0.0
        %1602 = vmatprep.subr.mxu0 0.0
        %1603 = vmatpush1.msra.mxu0 0.0
        %1604 = vmatprep.subr.mxu0 0.0
        %1605 = vmatpush1.msra.mxu0 0.0
        %1606 = vmatprep.mubr.f32.mxu0 0.0
        %1607 = vmatmul.mubr.f32.gmra.mrb[0].mxu0 %v1353
        %v1608 = vpop.f32.mrb[0].mxu0
        %v1609 = vadd.f32 %v1335, %v1608
        %v1610 = vpop.f32.mrb[0].mxu0
        %v1611 = vadd.f32 %v1335, %v1610
        %1612 = vmatprep.mubr.f32.mxu0 0.0
        %1613 = vmatmul.mubr.f32.gmra.mrb[0].mxu0 %v1356
        %v1614 = vpop.f32.mrb[0].mxu0
        %v1615 = vadd.f32 %v1340, %v1614
        %v1616 = vpop.f32.mrb[0].mxu0
        %v1617 = vadd.f32 %v1340, %v1616
        %1618 = vmatprep.mubr.f32.mxu0 0.0
        %1619 = vmatmul.mubr.f32.gmra.mrb[0].mxu0 %v1359
        %v1620 = vpop.f32.mrb[0].mxu0
        %v1621 = vadd.f32 %v1345, %v1620
        %v1622 = vpop.f32.mrb[0].mxu0
        %v1623 = vadd.f32 %v1345, %v1622
        %1624 = vmatprep.mubr.f32.mxu0 0.0
        %1625 = vmatmul.mubr.f32.gmra.mrb[0].mxu0 %v1362
        %v1626 = vpop.f32.mrb[0].mxu0
        %v1627 = vadd.f32 %v1350, %v1626
        %v1628 = vpop.f32.mrb[0].mxu0
        %v1629 = vadd.f32 %v1350, %v1628
        %1630 = vdwg.mxu0
        %1631 = vmatprep.subr.mxu0 %v1297
        %1632 = vmatpush1.msra.mxu0 %v1296
        %1633 = vmatprep.subr.mxu0 %v1305
        %1634 = vmatpush1.msra.mxu0 %v1304
        %1635 = vmatprep.subr.mxu0 %v1313
        %1636 = vmatpush1.msra.mxu0 %v1312
        %1637 = vmatprep.subr.mxu0 %v1321
        %1638 = vmatpush1.msra.mxu0 %v1320
        %1639 = vmatprep.subr.mxu0 0.0
        %1640 = vmatpush1.msra.mxu0 0.0
        %1641 = vmatprep.subr.mxu0 0.0
        %1642 = vmatpush1.msra.mxu0 0.0
        %1643 = vmatprep.subr.mxu0 0.0
        %1644 = vmatpush1.msra.mxu0 0.0
        %1645 = vmatprep.subr.mxu0 0.0
        %1646 = vmatpush1.msra.mxu0 0.0
        %1647 = vmatprep.subr.mxu0 0.0
        %1648 = vmatpush1.msra.mxu0 0.0
        %1649 = vmatprep.subr.mxu0 0.0
        %1650 = vmatpush1.msra.mxu0 0.0
        %1651 = vmatprep.subr.mxu0 0.0
        %1652 = vmatpush1.msra.mxu0 0.0
        %1653 = vmatprep.subr.mxu0 0.0
        %1654 = vmatpush1.msra.mxu0 0.0
        %1655 = vmatprep.subr.mxu0 0.0
        %1656 = vmatpush1.msra.mxu0 0.0
        %1657 = vmatprep.subr.mxu0 0.0
        %1658 = vmatpush1.msra.mxu0 0.0
        %1659 = vmatprep.subr.mxu0 0.0
        %1660 = vmatpush1.msra.mxu0 0.0
        %1661 = vmatprep.subr.mxu0 0.0
        %1662 = vmatpush1.msra.mxu0 0.0
        %1663 = vmatprep.subr.mxu0 0.0
        %1664 = vmatpush1.msra.mxu0 0.0
        %1665 = vmatprep.subr.mxu0 0.0
        %1666 = vmatpush1.msra.mxu0 0.0
        %1667 = vmatprep.subr.mxu0 0.0
        %1668 = vmatpush1.msra.mxu0 0.0
        %1669 = vmatprep.subr.mxu0 0.0
        %1670 = vmatpush1.msra.mxu0 0.0
        %1671 = vmatprep.subr.mxu0 0.0
        %1672 = vmatpush1.msra.mxu0 0.0
        %1673 = vmatprep.subr.mxu0 0.0
        %1674 = vmatpush1.msra.mxu0 0.0
        %1675 = vmatprep.subr.mxu0 0.0
        %1676 = vmatpush1.msra.mxu0 0.0
        %1677 = vmatprep.subr.mxu0 0.0
        %1678 = vmatpush1.msra.mxu0 0.0
        %1679 = vmatprep.subr.mxu0 0.0
        %1680 = vmatpush1.msra.mxu0 0.0
        %1681 = vmatprep.subr.mxu0 0.0
        %1682 = vmatpush1.msra.mxu0 0.0
        %1683 = vmatprep.subr.mxu0 0.0
        %1684 = vmatpush1.msra.mxu0 0.0
        %1685 = vmatprep.subr.mxu0 0.0
        %1686 = vmatpush1.msra.mxu0 0.0
        %1687 = vmatprep.subr.mxu0 0.0
        %1688 = vmatpush1.msra.mxu0 0.0
        %1689 = vmatprep.subr.mxu0 0.0
        %1690 = vmatpush1.msra.mxu0 0.0
        %1691 = vmatprep.subr.mxu0 0.0
        %1692 = vmatpush1.msra.mxu0 0.0
        %1693 = vmatprep.subr.mxu0 0.0
        %1694 = vmatpush1.msra.mxu0 0.0
        %1695 = vmatprep.mubr.f32.mxu0 0.0
        %1696 = vmatmul.mubr.f32.gmra.mrb[0].mxu0 %v1353
        %v1697 = vpop.f32.mrb[0].mxu0
        %v1698 = vadd.f32 %v1335, %v1697
        %v1699 = vpop.f32.mrb[0].mxu0
        %v1700 = vadd.f32 %v1335, %v1699
        %1701 = vmatprep.mubr.f32.mxu0 0.0
        %1702 = vmatmul.mubr.f32.gmra.mrb[0].mxu0 %v1356
        %v1703 = vpop.f32.mrb[0].mxu0
        %v1704 = vadd.f32 %v1340, %v1703
        %v1705 = vpop.f32.mrb[0].mxu0
        %v1706 = vadd.f32 %v1340, %v1705
        %1707 = vmatprep.mubr.f32.mxu0 0.0
        %1708 = vmatmul.mubr.f32.gmra.mrb[0].mxu0 %v1359
        %v1709 = vpop.f32.mrb[0].mxu0
        %v1710 = vadd.f32 %v1345, %v1709
        %v1711 = vpop.f32.mrb[0].mxu0
        %v1712 = vadd.f32 %v1345, %v1711
        %1713 = vmatprep.mubr.f32.mxu0 0.0
        %1714 = vmatmul.mubr.f32.gmra.mrb[0].mxu0 %v1362
        %v1715 = vpop.f32.mrb[0].mxu0
        %v1716 = vadd.f32 %v1350, %v1715
        %v1717 = vpop.f32.mrb[0].mxu0
        %v1718 = vadd.f32 %v1350, %v1717
        %1719 = vdwg.mxu0
        %v1720 = vtanh.pop %v1431
        %v1721 = vtanh.pop %v1433
        %v1722 = vtanh.pop %v1520
        %v1723 = vtanh.pop %v1522
        %v1724 = vtanh.pop %v1609
        %v1725 = vtanh.pop %v1611
        %v1726 = vtanh.pop %v1698
        %v1727 = vtanh.pop %v1700
        %v1728 = vtanh.pop %v1437
        %v1729 = vtanh.pop %v1439
        %v1730 = vtanh.pop %v1526
        %v1731 = vtanh.pop %v1528
        %v1732 = vtanh.pop %v1615
        %v1733 = vtanh.pop %v1617
        %v1734 = vtanh.pop %v1704
        %v1735 = vtanh.pop %v1706
        %v1736 = vtanh.pop %v1443
        %v1737 = vtanh.pop %v1445
        %v1738 = vtanh.pop %v1532
        %v1739 = vtanh.pop %v1534
        %v1740 = vtanh.pop %v1621
        %v1741 = vtanh.pop %v1623
        %v1742 = vtanh.pop %v1710
        %v1743 = vtanh.pop %v1712
        %v1744 = vtanh.pop %v1449
        %v1745 = vtanh.pop %v1451
        %v1746 = vtanh.pop %v1538
        %v1747 = vtanh.pop %v1540
        %v1748 = vtanh.pop %v1627
        %v1749 = vtanh.pop %v1629
        %v1750 = vtanh.pop %v1716
        %v1751 = vtanh.pop %v1718
        %v1752 = vld [vmem:[%s5] sm:$0xff]
        %v1753 = vld [vmem:[%s5 + $0x8] sm:$0xff]
        %v1754 = vld [vmem:[%s5 + $0x10] sm:$0xff]
        %v1755 = vld [vmem:[%s5 + $0x18] sm:$0xff]
        %v1756 = vld [vmem:[%s6] sm:$0xff]
        %v1757 = vld [vmem:[%s6 + $0x8] sm:$0xff]
        %v1758 = vld [vmem:[%s6 + $0x10] sm:$0xff]
        %v1759 = vld [vmem:[%s6 + $0x18] sm:$0xff]
        %1761 = vset.pattern.permute.xlu0 0
        %1762 = vperm.xlu0 %1761, %v1756
        %v1763 = vpop.permute.xlu0 %1762
        %1766 = vset.pattern.permute.xlu0 0
        %1767 = vperm.xlu0 %1766, %v1757
        %v1768 = vpop.permute.xlu0 %1767
        %1771 = vset.pattern.permute.xlu0 0
        %1772 = vperm.xlu0 %1771, %v1758
        %v1773 = vpop.permute.xlu0 %1772
        %1776 = vset.pattern.permute.xlu0 0
        %1777 = vperm.xlu0 %1776, %v1759
        %v1778 = vpop.permute.xlu0 %1777
        %v1781 = vsel %vm493, %v1752, 0
        %v1784 = vsel %vm493, %v1753, 0
        %v1787 = vsel %vm493, %v1754, 0
        %v1790 = vsel %vm493, %v1755, 0
        %1792 = vmatprep.subr.mxu0 %v1721
        %1793 = vmatpush1.msra.mxu0 %v1720
        %1794 = vmatprep.subr.mxu0 %v1729
        %1795 = vmatpush1.msra.mxu0 %v1728
        %1796 = vmatprep.subr.mxu0 %v1737
        %1797 = vmatpush1.msra.mxu0 %v1736
        %1798 = vmatprep.subr.mxu0 %v1745
        %1799 = vmatpush1.msra.mxu0 %v1744
        %1800 = vmatprep.subr.mxu0 0.0
        %1801 = vmatpush1.msra.mxu0 0.0
        %1802 = vmatprep.subr.mxu0 0.0
        %1803 = vmatpush1.msra.mxu0 0.0
        %1804 = vmatprep.subr.mxu0 0.0
        %1805 = vmatpush1.msra.mxu0 0.0
        %1806 = vmatprep.subr.mxu0 0.0
        %1807 = vmatpush1.msra.mxu0 0.0
        %1808 = vmatprep.subr.mxu0 0.0
        %1809 = vmatpush1.msra.mxu0 0.0
        %1810 = vmatprep.subr.mxu0 0.0
        %1811 = vmatpush1.msra.mxu0 0.0
        %1812 = vmatprep.subr.mxu0 0.0
        %1813 = vmatpush1.msra.mxu0 0.0
        %1814 = vmatprep.subr.mxu0 0.0
        %1815 = vmatpush1.msra.mxu0 0.0
        %1816 = vmatprep.subr.mxu0 0.0
        %1817 = vmatpush1.msra.mxu0 0.0
        %1818 = vmatprep.subr.mxu0 0.0
        %1819 = vmatpush1.msra.mxu0 0.0
        %1820 = vmatprep.subr.mxu0 0.0
        %1821 = vmatpush1.msra.mxu0 0.0
        %1822 = vmatprep.subr.mxu0 0.0
        %1823 = vmatpush1.msra.mxu0 0.0
        %1824 = vmatprep.subr.mxu0 0.0
        %1825 = vmatpush1.msra.mxu0 0.0
        %1826 = vmatprep.subr.mxu0 0.0
        %1827 = vmatpush1.msra.mxu0 0.0
        %1828 = vmatprep.subr.mxu0 0.0
        %1829 = vmatpush1.msra.mxu0 0.0
        %1830 = vmatprep.subr.mxu0 0.0
        %1831 = vmatpush1.msra.mxu0 0.0
        %1832 = vmatprep.subr.mxu0 0.0
        %1833 = vmatpush1.msra.mxu0 0.0
        %1834 = vmatprep.subr.mxu0 0.0
        %1835 = vmatpush1.msra.mxu0 0.0
        %1836 = vmatprep.subr.mxu0 0.0
        %1837 = vmatpush1.msra.mxu0 0.0
        %1838 = vmatprep.subr.mxu0 0.0
        %1839 = vmatpush1.msra.mxu0 0.0
        %1840 = vmatprep.subr.mxu0 0.0
        %1841 = vmatpush1.msra.mxu0 0.0
        %1842 = vmatprep.subr.mxu0 0.0
        %1843 = vmatpush1.msra.mxu0 0.0
        %1844 = vmatprep.subr.mxu0 0.0
        %1845 = vmatpush1.msra.mxu0 0.0
        %1846 = vmatprep.subr.mxu0 0.0
        %1847 = vmatpush1.msra.mxu0 0.0
        %1848 = vmatprep.subr.mxu0 0.0
        %1849 = vmatpush1.msra.mxu0 0.0
        %1850 = vmatprep.subr.mxu0 0.0
        %1851 = vmatpush1.msra.mxu0 0.0
        %1852 = vmatprep.subr.mxu0 0.0
        %1853 = vmatpush1.msra.mxu0 0.0
        %1854 = vmatprep.subr.mxu0 0.0
        %1855 = vmatpush1.msra.mxu0 0.0
        %1856 = vmatprep.mubr.f32.mxu0 0.0
        %1857 = vmatmul.mubr.f32.gmra.mrb[0].mxu0 %v1781
        %v1858 = vpop.f32.mrb[0].mxu0
        %v1859 = vadd.f32 %v1763, %v1858
        %v1860 = vpop.f32.mrb[0].mxu0
        %v1861 = vadd.f32 %v1763, %v1860
        %1862 = vmatprep.mubr.f32.mxu0 0.0
        %1863 = vmatmul.mubr.f32.gmra.mrb[0].mxu0 %v1784
        %v1864 = vpop.f32.mrb[0].mxu0
        %v1865 = vadd.f32 %v1768, %v1864
        %v1866 = vpop.f32.mrb[0].mxu0
        %v1867 = vadd.f32 %v1768, %v1866
        %1868 = vmatprep.mubr.f32.mxu0 0.0
        %1869 = vmatmul.mubr.f32.gmra.mrb[0].mxu0 %v1787
        %v1870 = vpop.f32.mrb[0].mxu0
        %v1871 = vadd.f32 %v1773, %v1870
        %v1872 = vpop.f32.mrb[0].mxu0
        %v1873 = vadd.f32 %v1773, %v1872
        %1874 = vmatprep.mubr.f32.mxu0 0.0
        %1875 = vmatmul.mubr.f32.gmra.mrb[0].mxu0 %v1790
        %v1876 = vpop.f32.mrb[0].mxu0
        %v1877 = vadd.f32 %v1778, %v1876
        %v1878 = vpop.f32.mrb[0].mxu0
        %v1879 = vadd.f32 %v1778, %v1878
        %1880 = vdwg.mxu0
        %1881 = vmatprep.subr.mxu0 %v1723
        %1882 = vmatpush1.msra.mxu0 %v1722
        %1883 = vmatprep.subr.mxu0 %v1731
        %1884 = vmatpush1.msra.mxu0 %v1730
        %1885 = vmatprep.subr.mxu0 %v1739
        %1886 = vmatpush1.msra.mxu0 %v1738
        %1887 = vmatprep.subr.mxu0 %v1747
        %1888 = vmatpush1.msra.mxu0 %v1746
        %1889 = vmatprep.subr.mxu0 0.0
        %1890 = vmatpush1.msra.mxu0 0.0
        %1891 = vmatprep.subr.mxu0 0.0
        %1892 = vmatpush1.msra.mxu0 0.0
        %1893 = vmatprep.subr.mxu0 0.0
        %1894 = vmatpush1.msra.mxu0 0.0
        %1895 = vmatprep.subr.mxu0 0.0
        %1896 = vmatpush1.msra.mxu0 0.0
        %1897 = vmatprep.subr.mxu0 0.0
        %1898 = vmatpush1.msra.mxu0 0.0
        %1899 = vmatprep.subr.mxu0 0.0
        %1900 = vmatpush1.msra.mxu0 0.0
        %1901 = vmatprep.subr.mxu0 0.0
        %1902 = vmatpush1.msra.mxu0 0.0
        %1903 = vmatprep.subr.mxu0 0.0
        %1904 = vmatpush1.msra.mxu0 0.0
        %1905 = vmatprep.subr.mxu0 0.0
        %1906 = vmatpush1.msra.mxu0 0.0
        %1907 = vmatprep.subr.mxu0 0.0
        %1908 = vmatpush1.msra.mxu0 0.0
        %1909 = vmatprep.subr.mxu0 0.0
        %1910 = vmatpush1.msra.mxu0 0.0
        %1911 = vmatprep.subr.mxu0 0.0
        %1912 = vmatpush1.msra.mxu0 0.0
        %1913 = vmatprep.subr.mxu0 0.0
        %1914 = vmatpush1.msra.mxu0 0.0
        %1915 = vmatprep.subr.mxu0 0.0
        %1916 = vmatpush1.msra.mxu0 0.0
        %1917 = vmatprep.subr.mxu0 0.0
        %1918 = vmatpush1.msra.mxu0 0.0
        %1919 = vmatprep.subr.mxu0 0.0
        %1920 = vmatpush1.msra.mxu0 0.0
        %1921 = vmatprep.subr.mxu0 0.0
        %1922 = vmatpush1.msra.mxu0 0.0
        %1923 = vmatprep.subr.mxu0 0.0
        %1924 = vmatpush1.msra.mxu0 0.0
        %1925 = vmatprep.subr.mxu0 0.0
        %1926 = vmatpush1.msra.mxu0 0.0
        %1927 = vmatprep.subr.mxu0 0.0
        %1928 = vmatpush1.msra.mxu0 0.0
        %1929 = vmatprep.subr.mxu0 0.0
        %1930 = vmatpush1.msra.mxu0 0.0
        %1931 = vmatprep.subr.mxu0 0.0
        %1932 = vmatpush1.msra.mxu0 0.0
        %1933 = vmatprep.subr.mxu0 0.0
        %1934 = vmatpush1.msra.mxu0 0.0
        %1935 = vmatprep.subr.mxu0 0.0
        %1936 = vmatpush1.msra.mxu0 0.0
        %1937 = vmatprep.subr.mxu0 0.0
        %1938 = vmatpush1.msra.mxu0 0.0
        %1939 = vmatprep.subr.mxu0 0.0
        %1940 = vmatpush1.msra.mxu0 0.0
        %1941 = vmatprep.subr.mxu0 0.0
        %1942 = vmatpush1.msra.mxu0 0.0
        %1943 = vmatprep.subr.mxu0 0.0
        %1944 = vmatpush1.msra.mxu0 0.0
        %1945 = vmatprep.mubr.f32.mxu0 0.0
        %1946 = vmatmul.mubr.f32.gmra.mrb[0].mxu0 %v1781
        %v1947 = vpop.f32.mrb[0].mxu0
        %v1948 = vadd.f32 %v1763, %v1947
        %v1949 = vpop.f32.mrb[0].mxu0
        %v1950 = vadd.f32 %v1763, %v1949
        %1951 = vmatprep.mubr.f32.mxu0 0.0
        %1952 = vmatmul.mubr.f32.gmra.mrb[0].mxu0 %v1784
        %v1953 = vpop.f32.mrb[0].mxu0
        %v1954 = vadd.f32 %v1768, %v1953
        %v1955 = vpop.f32.mrb[0].mxu0
        %v1956 = vadd.f32 %v1768, %v1955
        %1957 = vmatprep.mubr.f32.mxu0 0.0
        %1958 = vmatmul.mubr.f32.gmra.mrb[0].mxu0 %v1787
        %v1959 = vpop.f32.mrb[0].mxu0
        %v1960 = vadd.f32 %v1773, %v1959
        %v1961 = vpop.f32.mrb[0].mxu0
        %v1962 = vadd.f32 %v1773, %v1961
        %1963 = vmatprep.mubr.f32.mxu0 0.0
        %1964 = vmatmul.mubr.f32.gmra.mrb[0].mxu0 %v1790
        %v1965 = vpop.f32.mrb[0].mxu0
        %v1966 = vadd.f32 %v1778, %v1965
        %v1967 = vpop.f32.mrb[0].mxu0
        %v1968 = vadd.f32 %v1778, %v1967
        %1969 = vdwg.mxu0
        %1970 = vmatprep.subr.mxu0 %v1725
        %1971 = vmatpush1.msra.mxu0 %v1724
        %1972 = vmatprep.subr.mxu0 %v1733
        %1973 = vmatpush1.msra.mxu0 %v1732
        %1974 = vmatprep.subr.mxu0 %v1741
        %1975 = vmatpush1.msra.mxu0 %v1740
        %1976 = vmatprep.subr.mxu0 %v1749
        %1977 = vmatpush1.msra.mxu0 %v1748
        %1978 = vmatprep.subr.mxu0 0.0
        %1979 = vmatpush1.msra.mxu0 0.0
        %1980 = vmatprep.subr.mxu0 0.0
        %1981 = vmatpush1.msra.mxu0 0.0
        %1982 = vmatprep.subr.mxu0 0.0
        %1983 = vmatpush1.msra.mxu0 0.0
        %1984 = vmatprep.subr.mxu0 0.0
        %1985 = vmatpush1.msra.mxu0 0.0
        %1986 = vmatprep.subr.mxu0 0.0
        %1987 = vmatpush1.msra.mxu0 0.0
        %1988 = vmatprep.subr.mxu0 0.0
        %1989 = vmatpush1.msra.mxu0 0.0
        %1990 = vmatprep.subr.mxu0 0.0
        %1991 = vmatpush1.msra.mxu0 0.0
        %1992 = vmatprep.subr.mxu0 0.0
        %1993 = vmatpush1.msra.mxu0 0.0
        %1994 = vmatprep.subr.mxu0 0.0
        %1995 = vmatpush1.msra.mxu0 0.0
        %1996 = vmatprep.subr.mxu0 0.0
        %1997 = vmatpush1.msra.mxu0 0.0
        %1998 = vmatprep.subr.mxu0 0.0
        %1999 = vmatpush1.msra.mxu0 0.0
        %2000 = vmatprep.subr.mxu0 0.0
        %2001 = vmatpush1.msra.mxu0 0.0
        %2002 = vmatprep.subr.mxu0 0.0
        %2003 = vmatpush1.msra.mxu0 0.0
        %2004 = vmatprep.subr.mxu0 0.0
        %2005 = vmatpush1.msra.mxu0 0.0
        %2006 = vmatprep.subr.mxu0 0.0
        %2007 = vmatpush1.msra.mxu0 0.0
        %2008 = vmatprep.subr.mxu0 0.0
        %2009 = vmatpush1.msra.mxu0 0.0
        %2010 = vmatprep.subr.mxu0 0.0
        %2011 = vmatpush1.msra.mxu0 0.0
        %2012 = vmatprep.subr.mxu0 0.0
        %2013 = vmatpush1.msra.mxu0 0.0
        %2014 = vmatprep.subr.mxu0 0.0
        %2015 = vmatpush1.msra.mxu0 0.0
        %2016 = vmatprep.subr.mxu0 0.0
        %2017 = vmatpush1.msra.mxu0 0.0
        %2018 = vmatprep.subr.mxu0 0.0
        %2019 = vmatpush1.msra.mxu0 0.0
        %2020 = vmatprep.subr.mxu0 0.0
        %2021 = vmatpush1.msra.mxu0 0.0
        %2022 = vmatprep.subr.mxu0 0.0
        %2023 = vmatpush1.msra.mxu0 0.0
        %2024 = vmatprep.subr.mxu0 0.0
        %2025 = vmatpush1.msra.mxu0 0.0
        %2026 = vmatprep.subr.mxu0 0.0
        %2027 = vmatpush1.msra.mxu0 0.0
        %2028 = vmatprep.subr.mxu0 0.0
        %2029 = vmatpush1.msra.mxu0 0.0
        %2030 = vmatprep.subr.mxu0 0.0
        %2031 = vmatpush1.msra.mxu0 0.0
        %2032 = vmatprep.subr.mxu0 0.0
        %2033 = vmatpush1.msra.mxu0 0.0
        %2034 = vmatprep.mubr.f32.mxu0 0.0
        %2035 = vmatmul.mubr.f32.gmra.mrb[0].mxu0 %v1781
        %v2036 = vpop.f32.mrb[0].mxu0
        %v2037 = vadd.f32 %v1763, %v2036
        %v2038 = vpop.f32.mrb[0].mxu0
        %v2039 = vadd.f32 %v1763, %v2038
        %2040 = vmatprep.mubr.f32.mxu0 0.0
        %2041 = vmatmul.mubr.f32.gmra.mrb[0].mxu0 %v1784
        %v2042 = vpop.f32.mrb[0].mxu0
        %v2043 = vadd.f32 %v1768, %v2042
        %v2044 = vpop.f32.mrb[0].mxu0
        %v2045 = vadd.f32 %v1768, %v2044
        %2046 = vmatprep.mubr.f32.mxu0 0.0
        %2047 = vmatmul.mubr.f32.gmra.mrb[0].mxu0 %v1787
        %v2048 = vpop.f32.mrb[0].mxu0
        %v2049 = vadd.f32 %v1773, %v2048
        %v2050 = vpop.f32.mrb[0].mxu0
        %v2051 = vadd.f32 %v1773, %v2050
        %2052 = vmatprep.mubr.f32.mxu0 0.0
        %2053 = vmatmul.mubr.f32.gmra.mrb[0].mxu0 %v1790
        %v2054 = vpop.f32.mrb[0].mxu0
        %v2055 = vadd.f32 %v1778, %v2054
        %v2056 = vpop.f32.mrb[0].mxu0
        %v2057 = vadd.f32 %v1778, %v2056
        %2058 = vdwg.mxu0
        %2059 = vmatprep.subr.mxu0 %v1727
        %2060 = vmatpush1.msra.mxu0 %v1726
        %2061 = vmatprep.subr.mxu0 %v1735
        %2062 = vmatpush1.msra.mxu0 %v1734
        %2063 = vmatprep.subr.mxu0 %v1743
        %2064 = vmatpush1.msra.mxu0 %v1742
        %2065 = vmatprep.subr.mxu0 %v1751
        %2066 = vmatpush1.msra.mxu0 %v1750
        %2067 = vmatprep.subr.mxu0 0.0
        %2068 = vmatpush1.msra.mxu0 0.0
        %2069 = vmatprep.subr.mxu0 0.0
        %2070 = vmatpush1.msra.mxu0 0.0
        %2071 = vmatprep.subr.mxu0 0.0
        %2072 = vmatpush1.msra.mxu0 0.0
        %2073 = vmatprep.subr.mxu0 0.0
        %2074 = vmatpush1.msra.mxu0 0.0
        %2075 = vmatprep.subr.mxu0 0.0
        %2076 = vmatpush1.msra.mxu0 0.0
        %2077 = vmatprep.subr.mxu0 0.0
        %2078 = vmatpush1.msra.mxu0 0.0
        %2079 = vmatprep.subr.mxu0 0.0
        %2080 = vmatpush1.msra.mxu0 0.0
        %2081 = vmatprep.subr.mxu0 0.0
        %2082 = vmatpush1.msra.mxu0 0.0
        %2083 = vmatprep.subr.mxu0 0.0
        %2084 = vmatpush1.msra.mxu0 0.0
        %2085 = vmatprep.subr.mxu0 0.0
        %2086 = vmatpush1.msra.mxu0 0.0
        %2087 = vmatprep.subr.mxu0 0.0
        %2088 = vmatpush1.msra.mxu0 0.0
        %2089 = vmatprep.subr.mxu0 0.0
        %2090 = vmatpush1.msra.mxu0 0.0
        %2091 = vmatprep.subr.mxu0 0.0
        %2092 = vmatpush1.msra.mxu0 0.0
        %2093 = vmatprep.subr.mxu0 0.0
        %2094 = vmatpush1.msra.mxu0 0.0
        %2095 = vmatprep.subr.mxu0 0.0
        %2096 = vmatpush1.msra.mxu0 0.0
        %2097 = vmatprep.subr.mxu0 0.0
        %2098 = vmatpush1.msra.mxu0 0.0
        %2099 = vmatprep.subr.mxu0 0.0
        %2100 = vmatpush1.msra.mxu0 0.0
        %2101 = vmatprep.subr.mxu0 0.0
        %2102 = vmatpush1.msra.mxu0 0.0
        %2103 = vmatprep.subr.mxu0 0.0
        %2104 = vmatpush1.msra.mxu0 0.0
        %2105 = vmatprep.subr.mxu0 0.0
        %2106 = vmatpush1.msra.mxu0 0.0
        %2107 = vmatprep.subr.mxu0 0.0
        %2108 = vmatpush1.msra.mxu0 0.0
        %2109 = vmatprep.subr.mxu0 0.0
        %2110 = vmatpush1.msra.mxu0 0.0
        %2111 = vmatprep.subr.mxu0 0.0
        %2112 = vmatpush1.msra.mxu0 0.0
        %2113 = vmatprep.subr.mxu0 0.0
        %2114 = vmatpush1.msra.mxu0 0.0
        %2115 = vmatprep.subr.mxu0 0.0
        %2116 = vmatpush1.msra.mxu0 0.0
        %2117 = vmatprep.subr.mxu0 0.0
        %2118 = vmatpush1.msra.mxu0 0.0
        %2119 = vmatprep.subr.mxu0 0.0
        %2120 = vmatpush1.msra.mxu0 0.0
        %2121 = vmatprep.subr.mxu0 0.0
        %2122 = vmatpush1.msra.mxu0 0.0
        %2123 = vmatprep.mubr.f32.mxu0 0.0
        %2124 = vmatmul.mubr.f32.gmra.mrb[0].mxu0 %v1781
        %v2125 = vpop.f32.mrb[0].mxu0
        %v2126 = vadd.f32 %v1763, %v2125
        %v2127 = vpop.f32.mrb[0].mxu0
        %v2128 = vadd.f32 %v1763, %v2127
        %2129 = vmatprep.mubr.f32.mxu0 0.0
        %2130 = vmatmul.mubr.f32.gmra.mrb[0].mxu0 %v1784
        %v2131 = vpop.f32.mrb[0].mxu0
        %v2132 = vadd.f32 %v1768, %v2131
        %v2133 = vpop.f32.mrb[0].mxu0
        %v2134 = vadd.f32 %v1768, %v2133
        %2135 = vmatprep.mubr.f32.mxu0 0.0
        %2136 = vmatmul.mubr.f32.gmra.mrb[0].mxu0 %v1787
        %v2137 = vpop.f32.mrb[0].mxu0
        %v2138 = vadd.f32 %v1773, %v2137
        %v2139 = vpop.f32.mrb[0].mxu0
        %v2140 = vadd.f32 %v1773, %v2139
        %2141 = vmatprep.mubr.f32.mxu0 0.0
        %2142 = vmatmul.mubr.f32.gmra.mrb[0].mxu0 %v1790
        %v2143 = vpop.f32.mrb[0].mxu0
        %v2144 = vadd.f32 %v1778, %v2143
        %v2145 = vpop.f32.mrb[0].mxu0
        %v2146 = vadd.f32 %v1778, %v2145
        %2147 = vdwg.mxu0
        %2148 = vst [vmem:[%s347] sm:$0xff] %v1859
        %2149 = vst [vmem:[%s347 + $0x8] sm:$0xff] %v1861
        %2150 = vst [vmem:[%s347 + $0x10] sm:$0xff] %v1948
        %2151 = vst [vmem:[%s347 + $0x18] sm:$0xff] %v1950
        %2152 = vst [vmem:[%s347 + $0x20] sm:$0xff] %v2037
        %2153 = vst [vmem:[%s347 + $0x28] sm:$0xff] %v2039
        %2154 = vst [vmem:[%s347 + $0x30] sm:$0xff] %v2126
        %2155 = vst [vmem:[%s347 + $0x38] sm:$0xff] %v2128
        %2156 = vst [vmem:[%s347 + $0x40] sm:$0xff] %v1865
        %2157 = vst [vmem:[%s347 + $0x48] sm:$0xff] %v1867
        %2158 = vst [vmem:[%s347 + $0x50] sm:$0xff] %v1954
        %2159 = vst [vmem:[%s347 + $0x58] sm:$0xff] %v1956
        %2160 = vst [vmem:[%s347 + $0x60] sm:$0xff] %v2043
        %2161 = vst [vmem:[%s347 + $0x68] sm:$0xff] %v2045
        %2162 = vst [vmem:[%s347 + $0x70] sm:$0xff] %v2132
        %2163 = vst [vmem:[%s347 + $0x78] sm:$0xff] %v2134
        %2164 = vst [vmem:[%s354] sm:$0xff] %v1871
        %2165 = vst [vmem:[%s354 + $0x8] sm:$0xff] %v1873
        %2166 = vst [vmem:[%s354 + $0x10] sm:$0xff] %v1960
        %2167 = vst [vmem:[%s354 + $0x18] sm:$0xff] %v1962
        %2168 = vst [vmem:[%s354 + $0x20] sm:$0xff] %v2049
        %2169 = vst [vmem:[%s354 + $0x28] sm:$0xff] %v2051
        %2170 = vst [vmem:[%s354 + $0x30] sm:$0xff] %v2138
        %2171 = vst [vmem:[%s354 + $0x38] sm:$0xff] %v2140
        %2172 = vst [vmem:[%s354 + $0x40] sm:$0xff] %v1877
        %2173 = vst [vmem:[%s354 + $0x48] sm:$0xff] %v1879
        %2174 = vst [vmem:[%s354 + $0x50] sm:$0xff] %v1966
        %2175 = vst [vmem:[%s354 + $0x58] sm:$0xff] %v1968
        %2176 = vst [vmem:[%s354 + $0x60] sm:$0xff] %v2055
        %2177 = vst [vmem:[%s354 + $0x68] sm:$0xff] %v2057
        %2178 = vst [vmem:[%s354 + $0x70] sm:$0xff] %v2144
        %2179 = vst [vmem:[%s354 + $0x78] sm:$0xff] %v2146
        %s2180 = sand.u32 %s205, 1
        %s2181 = scalar_lea.sflag [#allocation4], %s2180
        %s2182 = sand.u32 %s205, 1
        %s2183 = smul.addr %s2182, 128
        %s2184 = scalar_lea.vmem [#allocation5], %s2183
        %s2185 = sand.u32 %s233, 1
        %s2186 = scalar_lea.sflag [#allocation7], %s2185
        %s2187 = sand.u32 %s233, 1
        %s2188 = smul.addr %s2187, 128
        %s2189 = scalar_lea.vmem [#allocation6], %s2188
        // Predicated region
        $region53: #{tpu_custom_call.1} parent=47 // pred_check
          %p2190 = pneg %p215
        $region54: #{tpu_custom_call.1} parent=47 // pred_check_branch
          %2192 = sbr.rel (%p2190) target = $region56
        $region55: #{tpu_custom_call.1} parent=47 // pred_region
          %s2193 = smul.u32 8, %s34
          %s2195 = ssub.s32 2048, 2048
          %2196 = vsyncadd %s2181, %s2195
          %s2197 = smul.addr %s33, 16
          %s2198 = sadd.s32 %s2193, %s2197
          %s2199 = smul.addr %s2198, 128
          %s2200 = scalar_lea.hbm %s7, %s2199
          %s2201 = sshll.u32 %s2184, 4
          %s2202 = int_to_ptr.vmem [resolvable:$true] %s2201
          %2207 = dma.vmem_to_hbm [thread:$0]  %s2202, 2048, %s2200, %s2181, 1024, 1024, 64
        $region56: #{tpu_custom_call.1} parent=47 // pred_fallthru
          _
        // Predicated region
        $region57: #{tpu_custom_call.1} parent=47 // pred_check
          %p2208 = pneg %p243
        $region58: #{tpu_custom_call.1} parent=47 // pred_check_branch
          %2210 = sbr.rel (%p2208) target = $region60
        $region59: #{tpu_custom_call.1} parent=47 // pred_region
          %s2211 = smul.u32 8, %s34
          %s2213 = ssub.s32 2048, 2048
          %2214 = vsyncadd %s2186, %s2213
          %s2215 = smul.addr %s33, 16
          %s2216 = sadd.s32 %s2211, %s2215
          %s2217 = smul.addr %s2216, 128
          %s2218 = scalar_lea.hbm %s8, %s2217
          %s2219 = sshll.u32 %s2189, 4
          %s2220 = int_to_ptr.vmem [resolvable:$true] %s2219
          %2225 = dma.vmem_to_hbm [thread:$0]  %s2220, 2048, %s2218, %s2186, 1024, 1024, 64
        $region60: #{tpu_custom_call.1} parent=47 // pred_fallthru
          _
      $region48: #{tpu_custom_call.1} parent=5 // pred_fallthru
        _
      %p2226 = scmp.le.s32.totalorder 2, %s24
      // Predicated region
      $region61: #{tpu_custom_call.1} parent=5 // pred_check
        %p2227 = pneg %p2226
      $region62: #{tpu_custom_call.1} parent=5 // pred_check_branch
        %2229 = sbr.rel (%p2227) target = $region64
      $region63: #{tpu_custom_call.1} parent=5 // pred_region
        %s2230 = ssub.s32 %s24, 2
        // Predicated region
        $region65: #{tpu_custom_call.1} parent=63 // pred_check
          %p2231 = pneg %p221
        $region66: #{tpu_custom_call.1} parent=63 // pred_check_branch
          %2233 = sbr.rel (%p2231) target = $region68
        $region67: #{tpu_custom_call.1} parent=63 // pred_region
          %s2234 = sand.u32 %s206, 1
          %s2235 = scalar_lea.sflag [#allocation4], %s2234
          %s2236 = sand.u32 %s206, 1
          %s2237 = smul.addr %s2236, 128
          %s2238 = scalar_lea.vmem [#allocation5], %s2237
          %2239 = dma.done %s2235, 2048
        $region68: #{tpu_custom_call.1} parent=63 // pred_fallthru
          _
        // Predicated region
        $region69: #{tpu_custom_call.1} parent=63 // pred_check
          %p2240 = pneg %p249
        $region70: #{tpu_custom_call.1} parent=63 // pred_check_branch
          %2242 = sbr.rel (%p2240) target = $region72
        $region71: #{tpu_custom_call.1} parent=63 // pred_region
          %s2243 = sand.u32 %s234, 1
          %s2244 = scalar_lea.sflag [#allocation7], %s2243
          %s2245 = sand.u32 %s234, 1
          %s2246 = smul.addr %s2245, 128
          %s2247 = scalar_lea.vmem [#allocation6], %s2246
          %2248 = dma.done %s2244, 2048
        $region72: #{tpu_custom_call.1} parent=63 // pred_fallthru
          _
      $region64: #{tpu_custom_call.1} parent=5 // pred_fallthru
        _
    $region6: #{tpu_custom_call.1} parent=1 // loop_footer
      %s28 = sadd.s32 1, %s24
    $region7: #{tpu_custom_call.1} parent=1 // loop_footer_branch
      %23 = sbr.rel target = $region3
    $region8: #{tpu_custom_call.1} parent=1 // loop_exit
      _
    %2249 = vsyncpa [#allocation3], 1
    %s2250 = scalar_lea.sflag [#allocation3], 1
    %2251 = vsyncpa %s2250, 1
    %2252 = vsyncpa [#allocation4], 1
    %s2253 = scalar_lea.sflag [#allocation4], 1
    %2254 = vsyncpa %s2253, 1
    %2255 = vsyncpa [#allocation7], 1
    %s2256 = scalar_lea.sflag [#allocation7], 1
    %2257 = vsyncpa %s2256, 1

</llo_original>
